<compile_context>
chip_gen: v7x
topology: tpu7x:2x2x1
jax: 0.10.0
libtpu: 0.0.40
codegen_flags: <defaults>
</compile_context>

<pallas_src>
import jax
import jax.numpy as jnp
from jax.experimental import pallas as pl
from jax.experimental.pallas import tpu as pltpu

DIMS = [784, 512, 256, 128, 64, 10]
H4_PAD = 128     # 64-wide hidden layer padded to a full lane width
OUT_PAD = 128    # final 10-wide output padded to a full lane width


def _round_up(x, m):
    return (x + m - 1) // m * m


def mlp_kernel(x_ref,
               w1_ref, b1_ref,
               w2_ref, b2_ref,
               w3_ref, b3_ref,
               w4_ref, b4_ref,
               w5_ref, b5_ref,
               o_ref):
    # Input arrives f32 and is cast to bf16 in-kernel; MXU accumulates in f32;
    # bias-add stays f32; cast-to-bf16 happens before the ReLU (bit-identical
    # to relu-then-cast, half the live intermediate).
    h = x_ref[...].astype(jnp.bfloat16)
    h = jnp.dot(h, w1_ref[...], preferred_element_type=jnp.float32) + b1_ref[...]
    h = jnp.maximum(h.astype(jnp.bfloat16), 0)
    h = jnp.dot(h, w2_ref[...], preferred_element_type=jnp.float32) + b2_ref[...]
    h = jnp.maximum(h.astype(jnp.bfloat16), 0)
    h = jnp.dot(h, w3_ref[...], preferred_element_type=jnp.float32) + b3_ref[...]
    h = jnp.maximum(h.astype(jnp.bfloat16), 0)
    h = jnp.dot(h, w4_ref[...], preferred_element_type=jnp.float32) + b4_ref[...]
    h = jnp.maximum(h.astype(jnp.bfloat16), 0)
    o_ref[...] = (
        jnp.dot(h, w5_ref[...], preferred_element_type=jnp.float32) + b5_ref[...]
    )


def prepare_params(params):
    """One-time parameter prep: (out,in)->(in,out) transpose, bf16 cast, pads.

    Zero-padding the 64-wide hidden layer to 128 (both the layer-4 output and
    layer-5 input) and the final 10-wide output to 128 is mathematically inert
    (zero bias columns stay zero through ReLU; zero weight rows contribute 0).
    """
    (w1, b1), (w2, b2), (w3, b3), (w4, b4), (w5, b5) = params

    def prep_w(w, pad_in=None, pad_out=None):
        wt = w.T.astype(jnp.bfloat16)                      # (in, out)
        in_d, out_d = wt.shape
        pi = (pad_in or in_d) - in_d
        po = (pad_out or out_d) - out_d
        if pi or po:
            wt = jnp.pad(wt, ((0, pi), (0, po)))
        return wt

    def prep_b(b, pad_out=None):
        bb = b.astype(jnp.float32)[None, :]                # (1, out), f32
        po = (pad_out or bb.shape[1]) - bb.shape[1]
        if po:
            bb = jnp.pad(bb, ((0, 0), (0, po)))
        return bb

    return (prep_w(w1), prep_b(b1),
            prep_w(w2), prep_b(b2),
            prep_w(w3), prep_b(b3),
            prep_w(w4, pad_out=H4_PAD), prep_b(b4, pad_out=H4_PAD),
            prep_w(w5, pad_in=H4_PAD, pad_out=OUT_PAD), prep_b(b5, pad_out=OUT_PAD))


@jax.jit
def mlp_forward(x, prepared):
    """x: (B, 1, 28, 28) or (B, 784). prepared: output of prepare_params.

    Returns (B, 10) float32 logits.
    """
    x = x.reshape(-1, 784).astype(jnp.float32)             # x.view(-1, 784)
    B = x.shape[0]

    # Batch tile: large tiles amortize per-grid-step overhead; keep >= 2 grid
    # steps for mid/large batches so v7x can shard "parallel" across both TCs.
    if B <= 256:
        TM = _round_up(max(B, 1), 16)      # single tile (bf16 sublane packing)
    elif B < 1024:
        TM = 256                           # >= 2 grid steps
    elif B < 4096:
        TM = 512
    else:
        TM = 1024
    B_pad = _round_up(B, TM)
    if B_pad != B:
        x = jnp.pad(x, ((0, B_pad - B), (0, 0)))

    grid = (B_pad // TM,)

    def resident(arr):
        # Same block index every grid step -> single DMA, stays VMEM-resident.
        shape = arr.shape
        return pl.BlockSpec(shape, lambda i: (0,) * len(shape))

    in_specs = ([pl.BlockSpec((TM, 784), lambda i: (i, 0))]
                + [resident(a) for a in prepared])
    out_spec = pl.BlockSpec((TM, OUT_PAD), lambda i: (i, 0))

    mac = (784 * 512 + 512 * 256 + 256 * 128 + 128 * H4_PAD + H4_PAD * OUT_PAD)
    weight_bytes = 2 * mac + 4 * (512 + 256 + 128 + H4_PAD + OUT_PAD)
    cost = pl.CostEstimate(
        flops=2 * mac * B_pad,
        transcendentals=0,
        bytes_accessed=weight_bytes + 4 * B_pad * 784 + 4 * B_pad * OUT_PAD,
    )

    out = pl.pallas_call(
        mlp_kernel,
        out_shape=jax.ShapeDtypeStruct((B_pad, OUT_PAD), jnp.float32),
        grid=grid,
        in_specs=in_specs,
        out_specs=out_spec,
        compiler_params=pltpu.CompilerParams(
            dimension_semantics=("parallel",)),
        cost_estimate=cost,
    )(x, *prepared)

    return out[:B, :10]


def init_params(key):
    """Deterministic synthetic parameters with the module's shapes (f32)."""
    params = []
    for i in range(5):
        key, kw, kb = jax.random.split(key, 3)
        fan_in, fan_out = DIMS[i], DIMS[i + 1]
        scale = 1.0 / jnp.sqrt(fan_in)
        w = jax.random.uniform(kw, (fan_out, fan_in), jnp.float32, -scale, scale)
        b = jax.random.uniform(kb, (fan_out,), jnp.float32, -scale, scale)
        params.append((w, b))
    return params


def reference_forward_f32(x, params):
    """Pure-f32 reference (matches the PyTorch module math exactly)."""
    h = x.reshape(-1, 784)
    for i, (w, b) in enumerate(params):
        h = h @ w.T + b
        if i < 4:
            h = jnp.maximum(h, 0.0)
    return h


def reference_forward_bf16(x, params):
    """Reference with the same quantization as the kernel (bf16 in, f32 acc)."""
    h = x.reshape(-1, 784).astype(jnp.bfloat16)
    for i, (w, b) in enumerate(params):
        y = jnp.dot(h, w.T.astype(jnp.bfloat16),
                    preferred_element_type=jnp.float32) + b.astype(jnp.float32)
        h = jnp.maximum(y, 0.0).astype(jnp.bfloat16) if i < 4 else y
    return h


if __name__ == "__main__":
    key = jax.random.PRNGKey(0)
    kx, kx2, kp = jax.random.split(key, 3)

    params = init_params(kp)
    prepared = prepare_params(params)           # one-time weight prep

    # MNIST-like input: batch=8, NCHW (8, 1, 28, 28); forward flattens to 784.
    x = jax.random.normal(kx, (8, 1, 28, 28), jnp.float32)
    out = mlp_forward(x, prepared)
    out = jax.block_until_ready(out)
    assert out.shape == (8, 10)

    # Tight check against a reference using the same bf16/f32-acc math.
    ref_q = reference_forward_bf16(x, params)
    assert jnp.allclose(out, ref_q, atol=2e-3, rtol=2e-3), \
        "mismatch vs bf16 reference (small batch)"
    # Loose check against the pure-f32 PyTorch-equivalent math.
    ref_f32 = reference_forward_f32(x, params)
    assert jnp.allclose(out, ref_f32, atol=5e-2, rtol=5e-2), \
        "mismatch vs f32 reference (small batch)"

    # Exercise the multi-step grid / batch-padding path (B=300 -> TM=256, 2 steps).
    x2 = jax.random.normal(kx2, (300, 784), jnp.float32)
    out2 = jax.block_until_ready(mlp_forward(x2, prepared))
    assert out2.shape == (300, 10)
    ref_q2 = reference_forward_bf16(x2, params)
    assert jnp.allclose(out2, ref_q2, atol=2e-3, rtol=2e-3), \
        "mismatch vs bf16 reference (batched)"

    print("KERNEL_OK")
</pallas_src>

<mosaic_0001>
module attributes {stable_mosaic.version = 11 : i64} {
  func.func @mlp_kernel(%arg0: i32, %arg1: memref<16x784xf32, #tpu.memory_space<vmem>>, %arg2: memref<784x512xbf16, #tpu.memory_space<vmem>>, %arg3: memref<1x512xf32, #tpu.memory_space<vmem>>, %arg4: memref<512x256xbf16, #tpu.memory_space<vmem>>, %arg5: memref<1x256xf32, #tpu.memory_space<vmem>>, %arg6: memref<256x128xbf16, #tpu.memory_space<vmem>>, %arg7: memref<1x128xf32, #tpu.memory_space<vmem>>, %arg8: memref<128x128xbf16, #tpu.memory_space<vmem>>, %arg9: memref<1x128xf32, #tpu.memory_space<vmem>>, %arg10: memref<128x128xbf16, #tpu.memory_space<vmem>>, %arg11: memref<1x128xf32, #tpu.memory_space<vmem>>, %arg12: memref<16x128xf32, #tpu.memory_space<vmem>>) attributes {dimension_semantics = [#tpu.dimension_semantics<parallel>], iteration_bounds = array<i64: 1>, scalar_prefetch = 0 : i64, scratch_operands = 0 : i64, tpu.core_type = #tpu.core_type<tc>, window_params = [{transform_indices = @transform_0, window_bounds = array<i64: 16, 784>}, {pipeline_mode = #tpu.pipeline_mode<synchronous>, transform_indices = @transform_1, window_bounds = array<i64: 784, 512>}, {pipeline_mode = #tpu.pipeline_mode<synchronous>, transform_indices = @transform_2, window_bounds = array<i64: 1, 512>}, {pipeline_mode = #tpu.pipeline_mode<synchronous>, transform_indices = @transform_3, window_bounds = array<i64: 512, 256>}, {pipeline_mode = #tpu.pipeline_mode<synchronous>, transform_indices = @transform_4, window_bounds = array<i64: 1, 256>}, {pipeline_mode = #tpu.pipeline_mode<synchronous>, transform_indices = @transform_5, window_bounds = array<i64: 256, 128>}, {pipeline_mode = #tpu.pipeline_mode<synchronous>, transform_indices = @transform_6, window_bounds = array<i64: 1, 128>}, {pipeline_mode = #tpu.pipeline_mode<synchronous>, transform_indices = @transform_7, window_bounds = array<i64: 128, 128>}, {pipeline_mode = #tpu.pipeline_mode<synchronous>, transform_indices = @transform_8, window_bounds = array<i64: 1, 128>}, {pipeline_mode = #tpu.pipeline_mode<synchronous>, transform_indices = @transform_9, window_bounds = array<i64: 128, 128>}, {pipeline_mode = #tpu.pipeline_mode<synchronous>, transform_indices = @transform_10, window_bounds = array<i64: 1, 128>}, {transform_indices = @transform_11, window_bounds = array<i64: 16, 128>}]} {
    %c0 = arith.constant 0 : index
    %c0_0 = arith.constant 0 : index
    %0 = vector.load %arg1[%c0, %c0_0] : memref<16x784xf32, #tpu.memory_space<vmem>>, vector<16x784xf32>
    %1 = arith.truncf %0 : vector<16x784xf32> to vector<16x784xbf16>
    %c0_1 = arith.constant 0 : index
    %c0_2 = arith.constant 0 : index
    %2 = vector.load %arg2[%c0_1, %c0_2] : memref<784x512xbf16, #tpu.memory_space<vmem>>, vector<784x512xbf16>
    %cst = arith.constant dense<0.000000e+00> : vector<16x512xf32>
    %3 = tpu.matmul %1, %2, %cst {dimension_numbers = #tpu.dot_dimension_numbers<[1], [0], [0], [1], [0, 0, 1, 1], [], []>} : vector<16x784xbf16>, vector<784x512xbf16>, vector<16x512xf32> -> vector<16x512xf32>
    %c0_3 = arith.constant 0 : index
    %c0_4 = arith.constant 0 : index
    %4 = vector.load %arg3[%c0_3, %c0_4] : memref<1x512xf32, #tpu.memory_space<vmem>>, vector<1x512xf32>
    %5 = vector.broadcast %4 : vector<1x512xf32> to vector<16x512xf32>
    %6 = arith.addf %3, %5 : vector<16x512xf32>
    %7 = arith.truncf %6 : vector<16x512xf32> to vector<16x512xbf16>
    %cst_5 = arith.constant 0.000000e+00 : bf16
    %8 = vector.broadcast %cst_5 : bf16 to vector<16x512xbf16>
    %9 = arith.maximumf %7, %8 : vector<16x512xbf16>
    %c0_6 = arith.constant 0 : index
    %c0_7 = arith.constant 0 : index
    %10 = vector.load %arg4[%c0_6, %c0_7] : memref<512x256xbf16, #tpu.memory_space<vmem>>, vector<512x256xbf16>
    %cst_8 = arith.constant dense<0.000000e+00> : vector<16x256xf32>
    %11 = tpu.matmul %9, %10, %cst_8 {dimension_numbers = #tpu.dot_dimension_numbers<[1], [0], [0], [1], [0, 0, 1, 1], [], []>} : vector<16x512xbf16>, vector<512x256xbf16>, vector<16x256xf32> -> vector<16x256xf32>
    %c0_9 = arith.constant 0 : index
    %c0_10 = arith.constant 0 : index
    %12 = vector.load %arg5[%c0_9, %c0_10] : memref<1x256xf32, #tpu.memory_space<vmem>>, vector<1x256xf32>
    %13 = vector.broadcast %12 : vector<1x256xf32> to vector<16x256xf32>
    %14 = arith.addf %11, %13 : vector<16x256xf32>
    %15 = arith.truncf %14 : vector<16x256xf32> to vector<16x256xbf16>
    %cst_11 = arith.constant 0.000000e+00 : bf16
    %16 = vector.broadcast %cst_11 : bf16 to vector<16x256xbf16>
    %17 = arith.maximumf %15, %16 : vector<16x256xbf16>
    %c0_12 = arith.constant 0 : index
    %c0_13 = arith.constant 0 : index
    %18 = vector.load %arg6[%c0_12, %c0_13] : memref<256x128xbf16, #tpu.memory_space<vmem>>, vector<256x128xbf16>
    %cst_14 = arith.constant dense<0.000000e+00> : vector<16x128xf32>
    %19 = tpu.matmul %17, %18, %cst_14 {dimension_numbers = #tpu.dot_dimension_numbers<[1], [0], [0], [1], [0, 0, 1, 1], [], []>} : vector<16x256xbf16>, vector<256x128xbf16>, vector<16x128xf32> -> vector<16x128xf32>
    %c0_15 = arith.constant 0 : index
    %c0_16 = arith.constant 0 : index
    %20 = vector.load %arg7[%c0_15, %c0_16] : memref<1x128xf32, #tpu.memory_space<vmem>>, vector<1x128xf32>
    %21 = vector.broadcast %20 : vector<1x128xf32> to vector<16x128xf32>
    %22 = arith.addf %19, %21 : vector<16x128xf32>
    %23 = arith.truncf %22 : vector<16x128xf32> to vector<16x128xbf16>
    %cst_17 = arith.constant 0.000000e+00 : bf16
    %24 = vector.broadcast %cst_17 : bf16 to vector<16x128xbf16>
    %25 = arith.maximumf %23, %24 : vector<16x128xbf16>
    %c0_18 = arith.constant 0 : index
    %c0_19 = arith.constant 0 : index
    %26 = vector.load %arg8[%c0_18, %c0_19] : memref<128x128xbf16, #tpu.memory_space<vmem>>, vector<128x128xbf16>
    %cst_20 = arith.constant dense<0.000000e+00> : vector<16x128xf32>
    %27 = tpu.matmul %25, %26, %cst_20 {dimension_numbers = #tpu.dot_dimension_numbers<[1], [0], [0], [1], [0, 0, 1, 1], [], []>} : vector<16x128xbf16>, vector<128x128xbf16>, vector<16x128xf32> -> vector<16x128xf32>
    %c0_21 = arith.constant 0 : index
    %c0_22 = arith.constant 0 : index
    %28 = vector.load %arg9[%c0_21, %c0_22] : memref<1x128xf32, #tpu.memory_space<vmem>>, vector<1x128xf32>
    %29 = vector.broadcast %28 : vector<1x128xf32> to vector<16x128xf32>
    %30 = arith.addf %27, %29 : vector<16x128xf32>
    %31 = arith.truncf %30 : vector<16x128xf32> to vector<16x128xbf16>
    %cst_23 = arith.constant 0.000000e+00 : bf16
    %32 = vector.broadcast %cst_23 : bf16 to vector<16x128xbf16>
    %33 = arith.maximumf %31, %32 : vector<16x128xbf16>
    %c0_24 = arith.constant 0 : index
    %c0_25 = arith.constant 0 : index
    %34 = vector.load %arg10[%c0_24, %c0_25] : memref<128x128xbf16, #tpu.memory_space<vmem>>, vector<128x128xbf16>
    %cst_26 = arith.constant dense<0.000000e+00> : vector<16x128xf32>
    %35 = tpu.matmul %33, %34, %cst_26 {dimension_numbers = #tpu.dot_dimension_numbers<[1], [0], [0], [1], [0, 0, 1, 1], [], []>} : vector<16x128xbf16>, vector<128x128xbf16>, vector<16x128xf32> -> vector<16x128xf32>
    %c0_27 = arith.constant 0 : index
    %c0_28 = arith.constant 0 : index
    %36 = vector.load %arg11[%c0_27, %c0_28] : memref<1x128xf32, #tpu.memory_space<vmem>>, vector<1x128xf32>
    %37 = vector.broadcast %36 : vector<1x128xf32> to vector<16x128xf32>
    %38 = arith.addf %35, %37 : vector<16x128xf32>
    %c0_29 = arith.constant 0 : index
    %c0_30 = arith.constant 0 : index
    %39 = vector.load %arg12[%c0_29, %c0_30] : memref<16x128xf32, #tpu.memory_space<vmem>>, vector<16x128xf32>
    tpu.vector_store %arg12[%c0_29, %c0_30], %38 {strides = array<i32>} : memref<16x128xf32, #tpu.memory_space<vmem>>, vector<16x128xf32>,
    return
  }
  func.func @transform_0(%arg0: i32) -> (i32, i32) {
    %c0_i32 = arith.constant 0 : i32
    %c0_i32_0 = arith.constant 0 : i32
    return %arg0, %c0_i32 : i32, i32
  }
  func.func @transform_1(%arg0: i32) -> (i32, i32) {
    %c0_i32 = arith.constant 0 : i32
    %c0_i32_0 = arith.constant 0 : i32
    %c0_i32_1 = arith.constant 0 : i32
    return %c0_i32, %c0_i32_0 : i32, i32
  }
  func.func @transform_2(%arg0: i32) -> (i32, i32) {
    %c0_i32 = arith.constant 0 : i32
    %c0_i32_0 = arith.constant 0 : i32
    %c0_i32_1 = arith.constant 0 : i32
    return %c0_i32, %c0_i32_0 : i32, i32
  }
  func.func @transform_3(%arg0: i32) -> (i32, i32) {
    %c0_i32 = arith.constant 0 : i32
    %c0_i32_0 = arith.constant 0 : i32
    %c0_i32_1 = arith.constant 0 : i32
    return %c0_i32, %c0_i32_0 : i32, i32
  }
  func.func @transform_4(%arg0: i32) -> (i32, i32) {
    %c0_i32 = arith.constant 0 : i32
    %c0_i32_0 = arith.constant 0 : i32
    %c0_i32_1 = arith.constant 0 : i32
    return %c0_i32, %c0_i32_0 : i32, i32
  }
  func.func @transform_5(%arg0: i32) -> (i32, i32) {
    %c0_i32 = arith.constant 0 : i32
    %c0_i32_0 = arith.constant 0 : i32
    %c0_i32_1 = arith.constant 0 : i32
    return %c0_i32, %c0_i32_0 : i32, i32
  }
  func.func @transform_6(%arg0: i32) -> (i32, i32) {
    %c0_i32 = arith.constant 0 : i32
    %c0_i32_0 = arith.constant 0 : i32
    %c0_i32_1 = arith.constant 0 : i32
    return %c0_i32, %c0_i32_0 : i32, i32
  }
  func.func @transform_7(%arg0: i32) -> (i32, i32) {
    %c0_i32 = arith.constant 0 : i32
    %c0_i32_0 = arith.constant 0 : i32
    %c0_i32_1 = arith.constant 0 : i32
    return %c0_i32, %c0_i32_0 : i32, i32
  }
  func.func @transform_8(%arg0: i32) -> (i32, i32) {
    %c0_i32 = arith.constant 0 : i32
    %c0_i32_0 = arith.constant 0 : i32
    %c0_i32_1 = arith.constant 0 : i32
    return %c0_i32, %c0_i32_0 : i32, i32
  }
  func.func @transform_9(%arg0: i32) -> (i32, i32) {
    %c0_i32 = arith.constant 0 : i32
    %c0_i32_0 = arith.constant 0 : i32
    %c0_i32_1 = arith.constant 0 : i32
    return %c0_i32, %c0_i32_0 : i32, i32
  }
  func.func @transform_10(%arg0: i32) -> (i32, i32) {
    %c0_i32 = arith.constant 0 : i32
    %c0_i32_0 = arith.constant 0 : i32
    %c0_i32_1 = arith.constant 0 : i32
    return %c0_i32, %c0_i32_0 : i32, i32
  }
  func.func @transform_11(%arg0: i32) -> (i32, i32) {
    %c0_i32 = arith.constant 0 : i32
    %c0_i32_0 = arith.constant 0 : i32
    return %arg0, %c0_i32 : i32, i32
  }
}

</mosaic_0001>

<llo_original>
// kernel: mlp_forward.1
$region0: #{mlp_forward.1}
  #allocation0 [shape = 'u32[]', space=smem, size = 0x4, offset = 0x4, fixed_abs, tag = 'smem constant byte address 0x4 - core index']
  #allocation1 [shape = 'u32[144,128]{1,0:T(1,128)}', space=vmem, size = 0x12000, scoped, tag = 'internal scratch']
  %s0 = inlined_call_operand.vmem [shape: f32[16,784], index: 0, kind: input, shape index: {}]
  %s1 = inlined_call_operand.hbm [shape: bf16[784,512], index: 1, kind: input, shape index: {}]
  %s2 = inlined_call_operand.vmem [shape: f32[1,512], index: 2, kind: input, shape index: {}]
  %s3 = inlined_call_operand.vmem [shape: bf16[512,256], index: 3, kind: input, shape index: {}]
  %s4 = inlined_call_operand.vmem [shape: f32[1,256], index: 4, kind: input, shape index: {}]
  %s5 = inlined_call_operand.vmem [shape: bf16[256,128], index: 5, kind: input, shape index: {}]
  %s6 = inlined_call_operand.vmem [shape: f32[1,128], index: 6, kind: input, shape index: {}]
  %s7 = inlined_call_operand.vmem [shape: bf16[128,128], index: 7, kind: input, shape index: {}]
  %s8 = inlined_call_operand.vmem [shape: f32[1,128], index: 8, kind: input, shape index: {}]
  %s9 = inlined_call_operand.vmem [shape: bf16[128,128], index: 9, kind: input, shape index: {}]
  %s10 = inlined_call_operand.vmem [shape: f32[1,128], index: 10, kind: input, shape index: {}]
  %s11 = inlined_call_operand.vmem [shape: f32[16,128], index: 11, kind: output, shape index: {}]
  %s12 = sld [smem:[#allocation0]]
  $region58: #{mlp_forward.1} parent=0
    _
  %s14 = ssub.s32 1, %s12
  %s15 = scalar_select 0, %s14, %s12
  $region1: #{mlp_forward.1} parent=0
    #allocation2 [shape = 'u8[802816]{0}', space=vmem, size = 0xc4000, scoped, tag = 'input window, operand 1, single buffered']
    #allocation3 [shape = 's32[1]{0}', space=sflag, size = 0x4, scoped, tag = 'scoped memory for mlp_forward.1']
    %16 = vsyncpa [#allocation3], 0
    // Predicated region
    $region2: #{mlp_forward.1} parent=1 // pred_check
      _
    $region3: #{mlp_forward.1} parent=1 // pred_check_branch
      %18 = sbr.rel (0) target = $region5
    $region4: #{mlp_forward.1} parent=1 // pred_region
      _
    $region5: #{mlp_forward.1} parent=1 // pred_fallthru
      _
    // Predicated region
    $region6: #{mlp_forward.1} parent=1 // pred_check
      _
    $region7: #{mlp_forward.1} parent=1 // pred_check_branch
      %20 = sbr.rel (0) target = $region9
    $region8: #{mlp_forward.1} parent=1 // pred_region
      %s22 = ssub.s32 25088, 25088
      %23 = vsyncadd [#allocation3], %s22
      %s24 = sshll.u32 [#allocation2], 4
      %s25 = int_to_ptr.vmem [resolvable:$true] %s24
      %30 = dma.hbm_to_vmem [thread:$0]  %s1, 25088, %s25, [#allocation3], 256, 256, 16
    $region9: #{mlp_forward.1} parent=1 // pred_fallthru
      _
    // Predicated region
    $region10: #{mlp_forward.1} parent=1 // pred_check
      _
    $region11: #{mlp_forward.1} parent=1 // pred_check_branch
      %32 = sbr.rel (0) target = $region13
    $region12: #{mlp_forward.1} parent=1 // pred_region
      _
    $region13: #{mlp_forward.1} parent=1 // pred_fallthru
      _
    // Predicated region
    $region14: #{mlp_forward.1} parent=1 // pred_check
      _
    $region15: #{mlp_forward.1} parent=1 // pred_check_branch
      %34 = sbr.rel (0) target = $region17
    $region16: #{mlp_forward.1} parent=1 // pred_region
      _
    $region17: #{mlp_forward.1} parent=1 // pred_fallthru
      _
    // Predicated region
    $region18: #{mlp_forward.1} parent=1 // pred_check
      _
    $region19: #{mlp_forward.1} parent=1 // pred_check_branch
      %36 = sbr.rel (0) target = $region21
    $region20: #{mlp_forward.1} parent=1 // pred_region
      _
    $region21: #{mlp_forward.1} parent=1 // pred_fallthru
      _
    // Predicated region
    $region22: #{mlp_forward.1} parent=1 // pred_check
      _
    $region23: #{mlp_forward.1} parent=1 // pred_check_branch
      %38 = sbr.rel (0) target = $region25
    $region24: #{mlp_forward.1} parent=1 // pred_region
      _
    $region25: #{mlp_forward.1} parent=1 // pred_fallthru
      _
    // Predicated region
    $region26: #{mlp_forward.1} parent=1 // pred_check
      _
    $region27: #{mlp_forward.1} parent=1 // pred_check_branch
      %40 = sbr.rel (0) target = $region29
    $region28: #{mlp_forward.1} parent=1 // pred_region
      _
    $region29: #{mlp_forward.1} parent=1 // pred_fallthru
      _
    // Predicated region
    $region30: #{mlp_forward.1} parent=1 // pred_check
      _
    $region31: #{mlp_forward.1} parent=1 // pred_check_branch
      %42 = sbr.rel (0) target = $region33
    $region32: #{mlp_forward.1} parent=1 // pred_region
      _
    $region33: #{mlp_forward.1} parent=1 // pred_fallthru
      _
    // Predicated region
    $region34: #{mlp_forward.1} parent=1 // pred_check
      _
    $region35: #{mlp_forward.1} parent=1 // pred_check_branch
      %44 = sbr.rel (0) target = $region37
    $region36: #{mlp_forward.1} parent=1 // pred_region
      _
    $region37: #{mlp_forward.1} parent=1 // pred_fallthru
      _
    // Predicated region
    $region38: #{mlp_forward.1} parent=1 // pred_check
      _
    $region39: #{mlp_forward.1} parent=1 // pred_check_branch
      %46 = sbr.rel (0) target = $region41
    $region40: #{mlp_forward.1} parent=1 // pred_region
      _
    $region41: #{mlp_forward.1} parent=1 // pred_fallthru
      _
    // Predicated region
    $region42: #{mlp_forward.1} parent=1 // pred_check
      _
    $region43: #{mlp_forward.1} parent=1 // pred_check_branch
      %48 = sbr.rel (0) target = $region45
    $region44: #{mlp_forward.1} parent=1 // pred_region
      _
    $region45: #{mlp_forward.1} parent=1 // pred_fallthru
      _
    // Predicated region
    $region46: #{mlp_forward.1} parent=1 // pred_check
      _
    $region47: #{mlp_forward.1} parent=1 // pred_check_branch
      %50 = sbr.rel (0) target = $region49
    $region48: #{mlp_forward.1} parent=1 // pred_region
      %51 = dma.done [#allocation3], 25088
    $region49: #{mlp_forward.1} parent=1 // pred_fallthru
      _
    %v53 = vld [vmem:[%s0] sm:$0xff]
    %v54 = vld [vmem:[%s0 + $0x8] sm:$0xff]
    %v55 = vld [vmem:[%s0 + $0x10] sm:$0xff]
    %v56 = vld [vmem:[%s0 + $0x18] sm:$0xff]
    %v57 = vld [vmem:[%s0 + $0x20] sm:$0xff]
    %v58 = vld [vmem:[%s0 + $0x28] sm:$0xff]
    %v59 = vld [vmem:[%s0 + $0x30] sm:$0xff]
    %v60 = vld [vmem:[%s0 + $0x38] sm:$0xff]
    %v61 = vld [vmem:[%s0 + $0x40] sm:$0xff]
    %v62 = vld [vmem:[%s0 + $0x48] sm:$0xff]
    %v63 = vld [vmem:[%s0 + $0x50] sm:$0xff]
    %v64 = vld [vmem:[%s0 + $0x58] sm:$0xff]
    %v65 = vld [vmem:[%s0 + $0x60] sm:$0xff]
    %v66 = vld [vmem:[%s0 + $0x68] sm:$0xff]
    %v67 = vpack.c.bf16 %v60, %v53
    %v68 = vpack.c.bf16 %v61, %v54
    %v69 = vpack.c.bf16 %v62, %v55
    %v70 = vpack.c.bf16 %v63, %v56
    %v71 = vpack.c.bf16 %v64, %v57
    %v72 = vpack.c.bf16 %v65, %v58
    %v73 = vpack.c.bf16 %v66, %v59
    %v74 = vld [vmem:[#allocation2] sm:$0xff]
    %v75 = vld [vmem:[#allocation2 + $0x8] sm:$0xff]
    %v76 = vld [vmem:[#allocation2 + $0x10] sm:$0xff]
    %v77 = vld [vmem:[#allocation2 + $0x18] sm:$0xff]
    %v78 = vld [vmem:[#allocation2 + $0x20] sm:$0xff]
    %v79 = vld [vmem:[#allocation2 + $0x28] sm:$0xff]
    %v80 = vld [vmem:[#allocation2 + $0x30] sm:$0xff]
    %v81 = vld [vmem:[#allocation2 + $0x38] sm:$0xff]
    %v82 = vld [vmem:[#allocation2 + $0x40] sm:$0xff]
    %v83 = vld [vmem:[#allocation2 + $0x48] sm:$0xff]
    %v84 = vld [vmem:[#allocation2 + $0x50] sm:$0xff]
    %v85 = vld [vmem:[#allocation2 + $0x58] sm:$0xff]
    %v86 = vld [vmem:[#allocation2 + $0x60] sm:$0xff]
    %v87 = vld [vmem:[#allocation2 + $0x68] sm:$0xff]
    %v88 = vld [vmem:[#allocation2 + $0x70] sm:$0xff]
    %v89 = vld [vmem:[#allocation2 + $0x78] sm:$0xff]
    %v90 = vld [vmem:[#allocation2 + $0x80] sm:$0xff]
    %v91 = vld [vmem:[#allocation2 + $0x88] sm:$0xff]
    %v92 = vld [vmem:[#allocation2 + $0x90] sm:$0xff]
    %v93 = vld [vmem:[#allocation2 + $0x98] sm:$0xff]
    %v94 = vld [vmem:[#allocation2 + $0xa0] sm:$0xff]
    %v95 = vld [vmem:[#allocation2 + $0xa8] sm:$0xff]
    %v96 = vld [vmem:[#allocation2 + $0xb0] sm:$0xff]
    %v97 = vld [vmem:[#allocation2 + $0xb8] sm:$0xff]
    %v98 = vld [vmem:[#allocation2 + $0xc0] sm:$0xff]
    %v99 = vld [vmem:[#allocation2 + $0xc8] sm:$0xff]
    %v100 = vld [vmem:[#allocation2 + $0xd0] sm:$0xff]
    %v101 = vld [vmem:[#allocation2 + $0xd8] sm:$0xff]
    %v102 = vld [vmem:[#allocation2 + $0xe0] sm:$0xff]
    %v103 = vld [vmem:[#allocation2 + $0xe8] sm:$0xff]
    %v104 = vld [vmem:[#allocation2 + $0xf0] sm:$0xff]
    %v105 = vld [vmem:[#allocation2 + $0xf8] sm:$0xff]
    %v106 = vld [vmem:[#allocation2 + $0x100] sm:$0xff]
    %v107 = vld [vmem:[#allocation2 + $0x108] sm:$0xff]
    %v108 = vld [vmem:[#allocation2 + $0x110] sm:$0xff]
    %v109 = vld [vmem:[#allocation2 + $0x118] sm:$0xff]
    %v110 = vld [vmem:[#allocation2 + $0x120] sm:$0xff]
    %v111 = vld [vmem:[#allocation2 + $0x128] sm:$0xff]
    %v112 = vld [vmem:[#allocation2 + $0x130] sm:$0xff]
    %v113 = vld [vmem:[#allocation2 + $0x138] sm:$0xff]
    %v114 = vld [vmem:[#allocation2 + $0x140] sm:$0xff]
    %v115 = vld [vmem:[#allocation2 + $0x148] sm:$0xff]
    %v116 = vld [vmem:[#allocation2 + $0x150] sm:$0xff]
    %v117 = vld [vmem:[#allocation2 + $0x158] sm:$0xff]
    %v118 = vld [vmem:[#allocation2 + $0x160] sm:$0xff]
    %v119 = vld [vmem:[#allocation2 + $0x168] sm:$0xff]
    %v120 = vld [vmem:[#allocation2 + $0x170] sm:$0xff]
    %v121 = vld [vmem:[#allocation2 + $0x178] sm:$0xff]
    %v122 = vld [vmem:[#allocation2 + $0x180] sm:$0xff]
    %v123 = vld [vmem:[#allocation2 + $0x188] sm:$0xff]
    %v124 = vld [vmem:[#allocation2 + $0x190] sm:$0xff]
    %v125 = vld [vmem:[#allocation2 + $0x198] sm:$0xff]
    %v126 = vld [vmem:[#allocation2 + $0x1a0] sm:$0xff]
    %v127 = vld [vmem:[#allocation2 + $0x1a8] sm:$0xff]
    %v128 = vld [vmem:[#allocation2 + $0x1b0] sm:$0xff]
    %v129 = vld [vmem:[#allocation2 + $0x1b8] sm:$0xff]
    %v130 = vld [vmem:[#allocation2 + $0x1c0] sm:$0xff]
    %v131 = vld [vmem:[#allocation2 + $0x1c8] sm:$0xff]
    %v132 = vld [vmem:[#allocation2 + $0x1d0] sm:$0xff]
    %v133 = vld [vmem:[#allocation2 + $0x1d8] sm:$0xff]
    %v134 = vld [vmem:[#allocation2 + $0x1e0] sm:$0xff]
    %v135 = vld [vmem:[#allocation2 + $0x1e8] sm:$0xff]
    %v136 = vld [vmem:[#allocation2 + $0x1f0] sm:$0xff]
    %v137 = vld [vmem:[#allocation2 + $0x1f8] sm:$0xff]
    %v138 = vld [vmem:[#allocation2 + $0x200] sm:$0xff]
    %v139 = vld [vmem:[#allocation2 + $0x208] sm:$0xff]
    %v140 = vld [vmem:[#allocation2 + $0x210] sm:$0xff]
    %v141 = vld [vmem:[#allocation2 + $0x218] sm:$0xff]
    %v142 = vld [vmem:[#allocation2 + $0x220] sm:$0xff]
    %v143 = vld [vmem:[#allocation2 + $0x228] sm:$0xff]
    %v144 = vld [vmem:[#allocation2 + $0x230] sm:$0xff]
    %v145 = vld [vmem:[#allocation2 + $0x238] sm:$0xff]
    %v146 = vld [vmem:[#allocation2 + $0x240] sm:$0xff]
    %v147 = vld [vmem:[#allocation2 + $0x248] sm:$0xff]
    %v148 = vld [vmem:[#allocation2 + $0x250] sm:$0xff]
    %v149 = vld [vmem:[#allocation2 + $0x258] sm:$0xff]
    %v150 = vld [vmem:[#allocation2 + $0x260] sm:$0xff]
    %v151 = vld [vmem:[#allocation2 + $0x268] sm:$0xff]
    %v152 = vld [vmem:[#allocation2 + $0x270] sm:$0xff]
    %v153 = vld [vmem:[#allocation2 + $0x278] sm:$0xff]
    %v154 = vld [vmem:[#allocation2 + $0x280] sm:$0xff]
    %v155 = vld [vmem:[#allocation2 + $0x288] sm:$0xff]
    %v156 = vld [vmem:[#allocation2 + $0x290] sm:$0xff]
    %v157 = vld [vmem:[#allocation2 + $0x298] sm:$0xff]
    %v158 = vld [vmem:[#allocation2 + $0x2a0] sm:$0xff]
    %v159 = vld [vmem:[#allocation2 + $0x2a8] sm:$0xff]
    %v160 = vld [vmem:[#allocation2 + $0x2b0] sm:$0xff]
    %v161 = vld [vmem:[#allocation2 + $0x2b8] sm:$0xff]
    %v162 = vld [vmem:[#allocation2 + $0x2c0] sm:$0xff]
    %v163 = vld [vmem:[#allocation2 + $0x2c8] sm:$0xff]
    %v164 = vld [vmem:[#allocation2 + $0x2d0] sm:$0xff]
    %v165 = vld [vmem:[#allocation2 + $0x2d8] sm:$0xff]
    %v166 = vld [vmem:[#allocation2 + $0x2e0] sm:$0xff]
    %v167 = vld [vmem:[#allocation2 + $0x2e8] sm:$0xff]
    %v168 = vld [vmem:[#allocation2 + $0x2f0] sm:$0xff]
    %v169 = vld [vmem:[#allocation2 + $0x2f8] sm:$0xff]
    %v170 = vld [vmem:[#allocation2 + $0x300] sm:$0xff]
    %v171 = vld [vmem:[#allocation2 + $0x308] sm:$0xff]
    %v172 = vld [vmem:[#allocation2 + $0x310] sm:$0xff]
    %v173 = vld [vmem:[#allocation2 + $0x318] sm:$0xff]
    %v174 = vld [vmem:[#allocation2 + $0x320] sm:$0xff]
    %v175 = vld [vmem:[#allocation2 + $0x328] sm:$0xff]
    %v176 = vld [vmem:[#allocation2 + $0x330] sm:$0xff]
    %v177 = vld [vmem:[#allocation2 + $0x338] sm:$0xff]
    %v178 = vld [vmem:[#allocation2 + $0x340] sm:$0xff]
    %v179 = vld [vmem:[#allocation2 + $0x348] sm:$0xff]
    %v180 = vld [vmem:[#allocation2 + $0x350] sm:$0xff]
    %v181 = vld [vmem:[#allocation2 + $0x358] sm:$0xff]
    %v182 = vld [vmem:[#allocation2 + $0x360] sm:$0xff]
    %v183 = vld [vmem:[#allocation2 + $0x368] sm:$0xff]
    %v184 = vld [vmem:[#allocation2 + $0x370] sm:$0xff]
    %v185 = vld [vmem:[#allocation2 + $0x378] sm:$0xff]
    %v186 = vld [vmem:[#allocation2 + $0x380] sm:$0xff]
    %v187 = vld [vmem:[#allocation2 + $0x388] sm:$0xff]
    %v188 = vld [vmem:[#allocation2 + $0x390] sm:$0xff]
    %v189 = vld [vmem:[#allocation2 + $0x398] sm:$0xff]
    %v190 = vld [vmem:[#allocation2 + $0x3a0] sm:$0xff]
    %v191 = vld [vmem:[#allocation2 + $0x3a8] sm:$0xff]
    %v192 = vld [vmem:[#allocation2 + $0x3b0] sm:$0xff]
    %v193 = vld [vmem:[#allocation2 + $0x3b8] sm:$0xff]
    %v194 = vld [vmem:[#allocation2 + $0x3c0] sm:$0xff]
    %v195 = vld [vmem:[#allocation2 + $0x3c8] sm:$0xff]
    %v196 = vld [vmem:[#allocation2 + $0x3d0] sm:$0xff]
    %v197 = vld [vmem:[#allocation2 + $0x3d8] sm:$0xff]
    %v198 = vld [vmem:[#allocation2 + $0x3e0] sm:$0xff]
    %v199 = vld [vmem:[#allocation2 + $0x3e8] sm:$0xff]
    %v200 = vld [vmem:[#allocation2 + $0x3f0] sm:$0xff]
    %v201 = vld [vmem:[#allocation2 + $0x3f8] sm:$0xff]
    %v202 = vld [vmem:[#allocation2 + $0x400] sm:$0xff]
    %v203 = vld [vmem:[#allocation2 + $0x408] sm:$0xff]
    %v204 = vld [vmem:[#allocation2 + $0x410] sm:$0xff]
    %v205 = vld [vmem:[#allocation2 + $0x418] sm:$0xff]
    %v206 = vld [vmem:[#allocation2 + $0x420] sm:$0xff]
    %v207 = vld [vmem:[#allocation2 + $0x428] sm:$0xff]
    %v208 = vld [vmem:[#allocation2 + $0x430] sm:$0xff]
    %v209 = vld [vmem:[#allocation2 + $0x438] sm:$0xff]
    %v210 = vld [vmem:[#allocation2 + $0x440] sm:$0xff]
    %v211 = vld [vmem:[#allocation2 + $0x448] sm:$0xff]
    %v212 = vld [vmem:[#allocation2 + $0x450] sm:$0xff]
    %v213 = vld [vmem:[#allocation2 + $0x458] sm:$0xff]
    %v214 = vld [vmem:[#allocation2 + $0x460] sm:$0xff]
    %v215 = vld [vmem:[#allocation2 + $0x468] sm:$0xff]
    %v216 = vld [vmem:[#allocation2 + $0x470] sm:$0xff]
    %v217 = vld [vmem:[#allocation2 + $0x478] sm:$0xff]
    %v218 = vld [vmem:[#allocation2 + $0x480] sm:$0xff]
    %v219 = vld [vmem:[#allocation2 + $0x488] sm:$0xff]
    %v220 = vld [vmem:[#allocation2 + $0x490] sm:$0xff]
    %v221 = vld [vmem:[#allocation2 + $0x498] sm:$0xff]
    %v222 = vld [vmem:[#allocation2 + $0x4a0] sm:$0xff]
    %v223 = vld [vmem:[#allocation2 + $0x4a8] sm:$0xff]
    %v224 = vld [vmem:[#allocation2 + $0x4b0] sm:$0xff]
    %v225 = vld [vmem:[#allocation2 + $0x4b8] sm:$0xff]
    %v226 = vld [vmem:[#allocation2 + $0x4c0] sm:$0xff]
    %v227 = vld [vmem:[#allocation2 + $0x4c8] sm:$0xff]
    %v228 = vld [vmem:[#allocation2 + $0x4d0] sm:$0xff]
    %v229 = vld [vmem:[#allocation2 + $0x4d8] sm:$0xff]
    %v230 = vld [vmem:[#allocation2 + $0x4e0] sm:$0xff]
    %v231 = vld [vmem:[#allocation2 + $0x4e8] sm:$0xff]
    %v232 = vld [vmem:[#allocation2 + $0x4f0] sm:$0xff]
    %v233 = vld [vmem:[#allocation2 + $0x4f8] sm:$0xff]
    %v234 = vld [vmem:[#allocation2 + $0x500] sm:$0xff]
    %v235 = vld [vmem:[#allocation2 + $0x508] sm:$0xff]
    %v236 = vld [vmem:[#allocation2 + $0x510] sm:$0xff]
    %v237 = vld [vmem:[#allocation2 + $0x518] sm:$0xff]
    %v238 = vld [vmem:[#allocation2 + $0x520] sm:$0xff]
    %v239 = vld [vmem:[#allocation2 + $0x528] sm:$0xff]
    %v240 = vld [vmem:[#allocation2 + $0x530] sm:$0xff]
    %v241 = vld [vmem:[#allocation2 + $0x538] sm:$0xff]
    %v242 = vld [vmem:[#allocation2 + $0x540] sm:$0xff]
    %v243 = vld [vmem:[#allocation2 + $0x548] sm:$0xff]
    %v244 = vld [vmem:[#allocation2 + $0x550] sm:$0xff]
    %v245 = vld [vmem:[#allocation2 + $0x558] sm:$0xff]
    %v246 = vld [vmem:[#allocation2 + $0x560] sm:$0xff]
    %v247 = vld [vmem:[#allocation2 + $0x568] sm:$0xff]
    %v248 = vld [vmem:[#allocation2 + $0x570] sm:$0xff]
    %v249 = vld [vmem:[#allocation2 + $0x578] sm:$0xff]
    %v250 = vld [vmem:[#allocation2 + $0x580] sm:$0xff]
    %v251 = vld [vmem:[#allocation2 + $0x588] sm:$0xff]
    %v252 = vld [vmem:[#allocation2 + $0x590] sm:$0xff]
    %v253 = vld [vmem:[#allocation2 + $0x598] sm:$0xff]
    %v254 = vld [vmem:[#allocation2 + $0x5a0] sm:$0xff]
    %v255 = vld [vmem:[#allocation2 + $0x5a8] sm:$0xff]
    %v256 = vld [vmem:[#allocation2 + $0x5b0] sm:$0xff]
    %v257 = vld [vmem:[#allocation2 + $0x5b8] sm:$0xff]
    %v258 = vld [vmem:[#allocation2 + $0x5c0] sm:$0xff]
    %v259 = vld [vmem:[#allocation2 + $0x5c8] sm:$0xff]
    %v260 = vld [vmem:[#allocation2 + $0x5d0] sm:$0xff]
    %v261 = vld [vmem:[#allocation2 + $0x5d8] sm:$0xff]
    %v262 = vld [vmem:[#allocation2 + $0x5e0] sm:$0xff]
    %v263 = vld [vmem:[#allocation2 + $0x5e8] sm:$0xff]
    %v264 = vld [vmem:[#allocation2 + $0x5f0] sm:$0xff]
    %v265 = vld [vmem:[#allocation2 + $0x5f8] sm:$0xff]
    %v266 = vld [vmem:[#allocation2 + $0x600] sm:$0xff]
    %v267 = vld [vmem:[#allocation2 + $0x608] sm:$0xff]
    %v268 = vld [vmem:[#allocation2 + $0x610] sm:$0xff]
    %v269 = vld [vmem:[#allocation2 + $0x618] sm:$0xff]
    %v270 = vld [vmem:[%s2] sm:$0xf]
    %v272 = vlaneseq
    %v273 = vshrl.u32 %v272, 7
    %v274 = vsub.s32 0, %v273
    %v275 = vrot.slane %v270, %v274
    %v276 = vlaneseq
    %v277 = vshrl.u32 %v276, 7
    %v278 = vsub.s32 1, %v277
    %v279 = vrot.slane %v270, %v278
    %v280 = vlaneseq
    %v281 = vshrl.u32 %v280, 7
    %v282 = vsub.s32 2, %v281
    %v283 = vrot.slane %v270, %v282
    %v284 = vlaneseq
    %v285 = vshrl.u32 %v284, 7
    %v286 = vsub.s32 3, %v285
    %v287 = vrot.slane %v270, %v286
    %v488 = vunpack.c.l.b16 %v74
    %v489 = vunpack.c.h.b16 %v74
    %v490 = vunpack.c.l.b16 %v75
    %v491 = vunpack.c.h.b16 %v75
    %v492 = vunpack.c.l.b16 %v76
    %v493 = vunpack.c.h.b16 %v76
    %v494 = vunpack.c.l.b16 %v77
    %v495 = vunpack.c.h.b16 %v77
    %v496 = vunpack.c.l.b16 %v78
    %v497 = vunpack.c.h.b16 %v78
    %v498 = vunpack.c.l.b16 %v79
    %v499 = vunpack.c.h.b16 %v79
    %v500 = vunpack.c.l.b16 %v80
    %v501 = vunpack.c.h.b16 %v80
    %v502 = vunpack.c.l.b16 %v81
    %v503 = vunpack.c.h.b16 %v81
    %v504 = vunpack.c.l.b16 %v82
    %v505 = vunpack.c.h.b16 %v82
    %v506 = vunpack.c.l.b16 %v83
    %v507 = vunpack.c.h.b16 %v83
    %v508 = vunpack.c.l.b16 %v84
    %v509 = vunpack.c.h.b16 %v84
    %v510 = vunpack.c.l.b16 %v85
    %v511 = vunpack.c.h.b16 %v85
    %v512 = vunpack.c.l.b16 %v86
    %v513 = vunpack.c.h.b16 %v86
    %v514 = vunpack.c.l.b16 %v87
    %v515 = vunpack.c.h.b16 %v87
    %v516 = vunpack.c.l.b16 %v88
    %v517 = vunpack.c.h.b16 %v88
    %v518 = vunpack.c.l.b16 %v89
    %v519 = vunpack.c.h.b16 %v89
    %v520 = vunpack.c.l.b16 %v90
    %v521 = vunpack.c.h.b16 %v90
    %v522 = vunpack.c.l.b16 %v91
    %v523 = vunpack.c.h.b16 %v91
    %v524 = vunpack.c.l.b16 %v92
    %v525 = vunpack.c.h.b16 %v92
    %v526 = vunpack.c.l.b16 %v93
    %v527 = vunpack.c.h.b16 %v93
    %v528 = vunpack.c.l.b16 %v94
    %v529 = vunpack.c.h.b16 %v94
    %v530 = vunpack.c.l.b16 %v95
    %v531 = vunpack.c.h.b16 %v95
    %v532 = vunpack.c.l.b16 %v96
    %v533 = vunpack.c.h.b16 %v96
    %v534 = vunpack.c.l.b16 %v97
    %v535 = vunpack.c.h.b16 %v97
    %v536 = vunpack.c.l.b16 %v98
    %v537 = vunpack.c.h.b16 %v98
    %v538 = vunpack.c.l.b16 %v99
    %v539 = vunpack.c.h.b16 %v99
    %v540 = vunpack.c.l.b16 %v100
    %v541 = vunpack.c.h.b16 %v100
    %v542 = vunpack.c.l.b16 %v101
    %v543 = vunpack.c.h.b16 %v101
    %v544 = vunpack.c.l.b16 %v102
    %v545 = vunpack.c.h.b16 %v102
    %v546 = vunpack.c.l.b16 %v103
    %v547 = vunpack.c.h.b16 %v103
    %v548 = vunpack.c.l.b16 %v104
    %v549 = vunpack.c.h.b16 %v104
    %v550 = vunpack.c.l.b16 %v105
    %v551 = vunpack.c.h.b16 %v105
    %v552 = vunpack.c.l.b16 %v106
    %v553 = vunpack.c.h.b16 %v106
    %v554 = vunpack.c.l.b16 %v107
    %v555 = vunpack.c.h.b16 %v107
    %v556 = vunpack.c.l.b16 %v108
    %v557 = vunpack.c.h.b16 %v108
    %v558 = vunpack.c.l.b16 %v109
    %v559 = vunpack.c.h.b16 %v109
    %v560 = vunpack.c.l.b16 %v110
    %v561 = vunpack.c.h.b16 %v110
    %v562 = vunpack.c.l.b16 %v111
    %v563 = vunpack.c.h.b16 %v111
    %v564 = vunpack.c.l.b16 %v112
    %v565 = vunpack.c.h.b16 %v112
    %v566 = vunpack.c.l.b16 %v113
    %v567 = vunpack.c.h.b16 %v113
    %v568 = vunpack.c.l.b16 %v114
    %v569 = vunpack.c.h.b16 %v114
    %v570 = vunpack.c.l.b16 %v115
    %v571 = vunpack.c.h.b16 %v115
    %v572 = vunpack.c.l.b16 %v116
    %v573 = vunpack.c.h.b16 %v116
    %v574 = vunpack.c.l.b16 %v117
    %v575 = vunpack.c.h.b16 %v117
    %v576 = vunpack.c.l.b16 %v118
    %v577 = vunpack.c.h.b16 %v118
    %v578 = vunpack.c.l.b16 %v119
    %v579 = vunpack.c.h.b16 %v119
    %v580 = vunpack.c.l.b16 %v120
    %v581 = vunpack.c.h.b16 %v120
    %v582 = vunpack.c.l.b16 %v121
    %v583 = vunpack.c.h.b16 %v121
    %v584 = vunpack.c.l.b16 %v122
    %v585 = vunpack.c.h.b16 %v122
    %v586 = vunpack.c.l.b16 %v123
    %v587 = vunpack.c.h.b16 %v123
    %v588 = vunpack.c.l.b16 %v124
    %v589 = vunpack.c.h.b16 %v124
    %v590 = vunpack.c.l.b16 %v125
    %v591 = vunpack.c.h.b16 %v125
    %v592 = vunpack.c.l.b16 %v126
    %v593 = vunpack.c.h.b16 %v126
    %v594 = vunpack.c.l.b16 %v127
    %v595 = vunpack.c.h.b16 %v127
    %v596 = vunpack.c.l.b16 %v128
    %v597 = vunpack.c.h.b16 %v128
    %v598 = vunpack.c.l.b16 %v129
    %v599 = vunpack.c.h.b16 %v129
    %v600 = vunpack.c.l.b16 %v130
    %v601 = vunpack.c.h.b16 %v130
    %v602 = vunpack.c.l.b16 %v131
    %v603 = vunpack.c.h.b16 %v131
    %v604 = vunpack.c.l.b16 %v132
    %v605 = vunpack.c.h.b16 %v132
    %v606 = vunpack.c.l.b16 %v133
    %v607 = vunpack.c.h.b16 %v133
    %v608 = vunpack.c.l.b16 %v134
    %v609 = vunpack.c.h.b16 %v134
    %v610 = vunpack.c.l.b16 %v135
    %v611 = vunpack.c.h.b16 %v135
    %v612 = vunpack.c.l.b16 %v136
    %v613 = vunpack.c.h.b16 %v136
    %v614 = vunpack.c.l.b16 %v137
    %v615 = vunpack.c.h.b16 %v137
    %v616 = vunpack.c.l.b16 %v138
    %v617 = vunpack.c.h.b16 %v138
    %v618 = vunpack.c.l.b16 %v139
    %v619 = vunpack.c.h.b16 %v139
    %v620 = vunpack.c.l.b16 %v140
    %v621 = vunpack.c.h.b16 %v140
    %v622 = vunpack.c.l.b16 %v141
    %v623 = vunpack.c.h.b16 %v141
    %v624 = vunpack.c.l.b16 %v142
    %v625 = vunpack.c.h.b16 %v142
    %v626 = vunpack.c.l.b16 %v143
    %v627 = vunpack.c.h.b16 %v143
    %v628 = vunpack.c.l.b16 %v144
    %v629 = vunpack.c.h.b16 %v144
    %v630 = vunpack.c.l.b16 %v145
    %v631 = vunpack.c.h.b16 %v145
    %v632 = vunpack.c.l.b16 %v146
    %v633 = vunpack.c.h.b16 %v146
    %v634 = vunpack.c.l.b16 %v147
    %v635 = vunpack.c.h.b16 %v147
    %v636 = vunpack.c.l.b16 %v148
    %v637 = vunpack.c.h.b16 %v148
    %v638 = vunpack.c.l.b16 %v149
    %v639 = vunpack.c.h.b16 %v149
    %v640 = vunpack.c.l.b16 %v150
    %v641 = vunpack.c.h.b16 %v150
    %v642 = vunpack.c.l.b16 %v151
    %v643 = vunpack.c.h.b16 %v151
    %v644 = vunpack.c.l.b16 %v152
    %v645 = vunpack.c.h.b16 %v152
    %v646 = vunpack.c.l.b16 %v153
    %v647 = vunpack.c.h.b16 %v153
    %v648 = vunpack.c.l.b16 %v154
    %v649 = vunpack.c.h.b16 %v154
    %v650 = vunpack.c.l.b16 %v155
    %v651 = vunpack.c.h.b16 %v155
    %v652 = vunpack.c.l.b16 %v156
    %v653 = vunpack.c.h.b16 %v156
    %v654 = vunpack.c.l.b16 %v157
    %v655 = vunpack.c.h.b16 %v157
    %v656 = vunpack.c.l.b16 %v158
    %v657 = vunpack.c.h.b16 %v158
    %v658 = vunpack.c.l.b16 %v159
    %v659 = vunpack.c.h.b16 %v159
    %v660 = vunpack.c.l.b16 %v160
    %v661 = vunpack.c.h.b16 %v160
    %v662 = vunpack.c.l.b16 %v161
    %v663 = vunpack.c.h.b16 %v161
    %v664 = vunpack.c.l.b16 %v162
    %v665 = vunpack.c.h.b16 %v162
    %v666 = vunpack.c.l.b16 %v163
    %v667 = vunpack.c.h.b16 %v163
    %v668 = vunpack.c.l.b16 %v164
    %v669 = vunpack.c.h.b16 %v164
    %v670 = vunpack.c.l.b16 %v165
    %v671 = vunpack.c.h.b16 %v165
    %v672 = vunpack.c.l.b16 %v166
    %v673 = vunpack.c.h.b16 %v166
    %v674 = vunpack.c.l.b16 %v167
    %v675 = vunpack.c.h.b16 %v167
    %v676 = vunpack.c.l.b16 %v168
    %v677 = vunpack.c.h.b16 %v168
    %v678 = vunpack.c.l.b16 %v169
    %v679 = vunpack.c.h.b16 %v169
    %v680 = vunpack.c.l.b16 %v170
    %v681 = vunpack.c.h.b16 %v170
    %v682 = vunpack.c.l.b16 %v171
    %v683 = vunpack.c.h.b16 %v171
    %v684 = vunpack.c.l.b16 %v172
    %v685 = vunpack.c.h.b16 %v172
    %v686 = vunpack.c.l.b16 %v173
    %v687 = vunpack.c.h.b16 %v173
    %v688 = vunpack.c.l.b16 %v174
    %v689 = vunpack.c.h.b16 %v174
    %v690 = vunpack.c.l.b16 %v175
    %v691 = vunpack.c.h.b16 %v175
    %v692 = vunpack.c.l.b16 %v176
    %v693 = vunpack.c.h.b16 %v176
    %v694 = vunpack.c.l.b16 %v177
    %v695 = vunpack.c.h.b16 %v177
    %v696 = vunpack.c.l.b16 %v178
    %v697 = vunpack.c.h.b16 %v178
    %v698 = vunpack.c.l.b16 %v179
    %v699 = vunpack.c.h.b16 %v179
    %v700 = vunpack.c.l.b16 %v180
    %v701 = vunpack.c.h.b16 %v180
    %v702 = vunpack.c.l.b16 %v181
    %v703 = vunpack.c.h.b16 %v181
    %v704 = vunpack.c.l.b16 %v182
    %v705 = vunpack.c.h.b16 %v182
    %v706 = vunpack.c.l.b16 %v183
    %v707 = vunpack.c.h.b16 %v183
    %v708 = vunpack.c.l.b16 %v184
    %v709 = vunpack.c.h.b16 %v184
    %v710 = vunpack.c.l.b16 %v185
    %v711 = vunpack.c.h.b16 %v185
    %v712 = vunpack.c.l.b16 %v186
    %v713 = vunpack.c.h.b16 %v186
    %v714 = vunpack.c.l.b16 %v187
    %v715 = vunpack.c.h.b16 %v187
    %v716 = vunpack.c.l.b16 %v188
    %v717 = vunpack.c.h.b16 %v188
    %v718 = vunpack.c.l.b16 %v189
    %v719 = vunpack.c.h.b16 %v189
    %v720 = vunpack.c.l.b16 %v190
    %v721 = vunpack.c.h.b16 %v190
    %v722 = vunpack.c.l.b16 %v191
    %v723 = vunpack.c.h.b16 %v191
    %v724 = vunpack.c.l.b16 %v192
    %v725 = vunpack.c.h.b16 %v192
    %v726 = vunpack.c.l.b16 %v193
    %v727 = vunpack.c.h.b16 %v193
    %v728 = vunpack.c.l.b16 %v194
    %v729 = vunpack.c.h.b16 %v194
    %v730 = vunpack.c.l.b16 %v195
    %v731 = vunpack.c.h.b16 %v195
    %v732 = vunpack.c.l.b16 %v196
    %v733 = vunpack.c.h.b16 %v196
    %v734 = vunpack.c.l.b16 %v197
    %v735 = vunpack.c.h.b16 %v197
    %v736 = vunpack.c.l.b16 %v198
    %v737 = vunpack.c.h.b16 %v198
    %v738 = vunpack.c.l.b16 %v199
    %v739 = vunpack.c.h.b16 %v199
    %v740 = vunpack.c.l.b16 %v200
    %v741 = vunpack.c.h.b16 %v200
    %v742 = vunpack.c.l.b16 %v201
    %v743 = vunpack.c.h.b16 %v201
    %v744 = vunpack.c.l.b16 %v202
    %v745 = vunpack.c.h.b16 %v202
    %v746 = vunpack.c.l.b16 %v203
    %v747 = vunpack.c.h.b16 %v203
    %v748 = vunpack.c.l.b16 %v204
    %v749 = vunpack.c.h.b16 %v204
    %v750 = vunpack.c.l.b16 %v205
    %v751 = vunpack.c.h.b16 %v205
    %v752 = vunpack.c.l.b16 %v206
    %v753 = vunpack.c.h.b16 %v206
    %v754 = vunpack.c.l.b16 %v207
    %v755 = vunpack.c.h.b16 %v207
    %v756 = vunpack.c.l.b16 %v208
    %v757 = vunpack.c.h.b16 %v208
    %v758 = vunpack.c.l.b16 %v209
    %v759 = vunpack.c.h.b16 %v209
    %v760 = vunpack.c.l.b16 %v210
    %v761 = vunpack.c.h.b16 %v210
    %v762 = vunpack.c.l.b16 %v211
    %v763 = vunpack.c.h.b16 %v211
    %v764 = vunpack.c.l.b16 %v212
    %v765 = vunpack.c.h.b16 %v212
    %v766 = vunpack.c.l.b16 %v213
    %v767 = vunpack.c.h.b16 %v213
    %v768 = vunpack.c.l.b16 %v214
    %v769 = vunpack.c.h.b16 %v214
    %v770 = vunpack.c.l.b16 %v215
    %v771 = vunpack.c.h.b16 %v215
    %v772 = vunpack.c.l.b16 %v216
    %v773 = vunpack.c.h.b16 %v216
    %v774 = vunpack.c.l.b16 %v217
    %v775 = vunpack.c.h.b16 %v217
    %v776 = vunpack.c.l.b16 %v218
    %v777 = vunpack.c.h.b16 %v218
    %v778 = vunpack.c.l.b16 %v219
    %v779 = vunpack.c.h.b16 %v219
    %v780 = vunpack.c.l.b16 %v220
    %v781 = vunpack.c.h.b16 %v220
    %v782 = vunpack.c.l.b16 %v221
    %v783 = vunpack.c.h.b16 %v221
    %v784 = vunpack.c.l.b16 %v222
    %v785 = vunpack.c.h.b16 %v222
    %v786 = vunpack.c.l.b16 %v223
    %v787 = vunpack.c.h.b16 %v223
    %v788 = vunpack.c.l.b16 %v224
    %v789 = vunpack.c.h.b16 %v224
    %v790 = vunpack.c.l.b16 %v225
    %v791 = vunpack.c.h.b16 %v225
    %v792 = vunpack.c.l.b16 %v226
    %v793 = vunpack.c.h.b16 %v226
    %v794 = vunpack.c.l.b16 %v227
    %v795 = vunpack.c.h.b16 %v227
    %v796 = vunpack.c.l.b16 %v228
    %v797 = vunpack.c.h.b16 %v228
    %v798 = vunpack.c.l.b16 %v229
    %v799 = vunpack.c.h.b16 %v229
    %v800 = vunpack.c.l.b16 %v230
    %v801 = vunpack.c.h.b16 %v230
    %v802 = vunpack.c.l.b16 %v231
    %v803 = vunpack.c.h.b16 %v231
    %v804 = vunpack.c.l.b16 %v232
    %v805 = vunpack.c.h.b16 %v232
    %v806 = vunpack.c.l.b16 %v233
    %v807 = vunpack.c.h.b16 %v233
    %v808 = vunpack.c.l.b16 %v234
    %v809 = vunpack.c.h.b16 %v234
    %v810 = vunpack.c.l.b16 %v235
    %v811 = vunpack.c.h.b16 %v235
    %v812 = vunpack.c.l.b16 %v236
    %v813 = vunpack.c.h.b16 %v236
    %v814 = vunpack.c.l.b16 %v237
    %v815 = vunpack.c.h.b16 %v237
    %v816 = vunpack.c.l.b16 %v238
    %v817 = vunpack.c.h.b16 %v238
    %v818 = vunpack.c.l.b16 %v239
    %v819 = vunpack.c.h.b16 %v239
    %v820 = vunpack.c.l.b16 %v240
    %v821 = vunpack.c.h.b16 %v240
    %v822 = vunpack.c.l.b16 %v241
    %v823 = vunpack.c.h.b16 %v241
    %v824 = vunpack.c.l.b16 %v242
    %v825 = vunpack.c.h.b16 %v242
    %v826 = vunpack.c.l.b16 %v243
    %v827 = vunpack.c.h.b16 %v243
    %v828 = vunpack.c.l.b16 %v244
    %v829 = vunpack.c.h.b16 %v244
    %v830 = vunpack.c.l.b16 %v245
    %v831 = vunpack.c.h.b16 %v245
    %v832 = vunpack.c.l.b16 %v246
    %v833 = vunpack.c.h.b16 %v246
    %v834 = vunpack.c.l.b16 %v247
    %v835 = vunpack.c.h.b16 %v247
    %v836 = vunpack.c.l.b16 %v248
    %v837 = vunpack.c.h.b16 %v248
    %v838 = vunpack.c.l.b16 %v249
    %v839 = vunpack.c.h.b16 %v249
    %v840 = vunpack.c.l.b16 %v250
    %v841 = vunpack.c.h.b16 %v250
    %v842 = vunpack.c.l.b16 %v251
    %v843 = vunpack.c.h.b16 %v251
    %v844 = vunpack.c.l.b16 %v252
    %v845 = vunpack.c.h.b16 %v252
    %v846 = vunpack.c.l.b16 %v253
    %v847 = vunpack.c.h.b16 %v253
    %v848 = vunpack.c.l.b16 %v254
    %v849 = vunpack.c.h.b16 %v254
    %v850 = vunpack.c.l.b16 %v255
    %v851 = vunpack.c.h.b16 %v255
    %v852 = vunpack.c.l.b16 %v256
    %v853 = vunpack.c.h.b16 %v256
    %v854 = vunpack.c.l.b16 %v257
    %v855 = vunpack.c.h.b16 %v257
    %v856 = vunpack.c.l.b16 %v258
    %v857 = vunpack.c.h.b16 %v258
    %v858 = vunpack.c.l.b16 %v259
    %v859 = vunpack.c.h.b16 %v259
    %v860 = vunpack.c.l.b16 %v260
    %v861 = vunpack.c.h.b16 %v260
    %v862 = vunpack.c.l.b16 %v261
    %v863 = vunpack.c.h.b16 %v261
    %v864 = vunpack.c.l.b16 %v262
    %v865 = vunpack.c.h.b16 %v262
    %v866 = vunpack.c.l.b16 %v263
    %v867 = vunpack.c.h.b16 %v263
    %v868 = vunpack.c.l.b16 %v264
    %v869 = vunpack.c.h.b16 %v264
    %v870 = vunpack.c.l.b16 %v265
    %v871 = vunpack.c.h.b16 %v265
    %v872 = vunpack.c.l.b16 %v266
    %v873 = vunpack.c.h.b16 %v266
    %v874 = vunpack.c.l.b16 %v267
    %v875 = vunpack.c.h.b16 %v267
    %v876 = vunpack.c.l.b16 %v268
    %v877 = vunpack.c.h.b16 %v268
    %v878 = vunpack.c.l.b16 %v269
    %v879 = vunpack.c.h.b16 %v269
    %v880 = vpack.c.b16 %v492, %v488
    %v881 = vpack.c.b16 %v493, %v489
    %v882 = vpack.c.b16 %v494, %v490
    %v883 = vpack.c.b16 %v495, %v491
    %v884 = vpack.c.b16 %v500, %v496
    %v885 = vpack.c.b16 %v501, %v497
    %v886 = vpack.c.b16 %v502, %v498
    %v887 = vpack.c.b16 %v503, %v499
    %v888 = vpack.c.b16 %v508, %v504
    %v889 = vpack.c.b16 %v509, %v505
    %v890 = vpack.c.b16 %v510, %v506
    %v891 = vpack.c.b16 %v511, %v507
    %v892 = vpack.c.b16 %v516, %v512
    %v893 = vpack.c.b16 %v517, %v513
    %v894 = vpack.c.b16 %v518, %v514
    %v895 = vpack.c.b16 %v519, %v515
    %v896 = vpack.c.b16 %v524, %v520
    %v897 = vpack.c.b16 %v525, %v521
    %v898 = vpack.c.b16 %v526, %v522
    %v899 = vpack.c.b16 %v527, %v523
    %v900 = vpack.c.b16 %v532, %v528
    %v901 = vpack.c.b16 %v533, %v529
    %v902 = vpack.c.b16 %v534, %v530
    %v903 = vpack.c.b16 %v535, %v531
    %v904 = vpack.c.b16 %v540, %v536
    %v905 = vpack.c.b16 %v541, %v537
    %v906 = vpack.c.b16 %v542, %v538
    %v907 = vpack.c.b16 %v543, %v539
    %v908 = vpack.c.b16 %v548, %v544
    %v909 = vpack.c.b16 %v549, %v545
    %v910 = vpack.c.b16 %v550, %v546
    %v911 = vpack.c.b16 %v551, %v547
    %v912 = vpack.c.b16 %v556, %v552
    %v913 = vpack.c.b16 %v557, %v553
    %v914 = vpack.c.b16 %v558, %v554
    %v915 = vpack.c.b16 %v559, %v555
    %v916 = vpack.c.b16 %v564, %v560
    %v917 = vpack.c.b16 %v565, %v561
    %v918 = vpack.c.b16 %v566, %v562
    %v919 = vpack.c.b16 %v567, %v563
    %v920 = vpack.c.b16 %v572, %v568
    %v921 = vpack.c.b16 %v573, %v569
    %v922 = vpack.c.b16 %v574, %v570
    %v923 = vpack.c.b16 %v575, %v571
    %v924 = vpack.c.b16 %v580, %v576
    %v925 = vpack.c.b16 %v581, %v577
    %v926 = vpack.c.b16 %v582, %v578
    %v927 = vpack.c.b16 %v583, %v579
    %v928 = vpack.c.b16 %v588, %v584
    %v929 = vpack.c.b16 %v589, %v585
    %v930 = vpack.c.b16 %v590, %v586
    %v931 = vpack.c.b16 %v591, %v587
    %v932 = vpack.c.b16 %v596, %v592
    %v933 = vpack.c.b16 %v597, %v593
    %v934 = vpack.c.b16 %v598, %v594
    %v935 = vpack.c.b16 %v599, %v595
    %v936 = vpack.c.b16 %v604, %v600
    %v937 = vpack.c.b16 %v605, %v601
    %v938 = vpack.c.b16 %v606, %v602
    %v939 = vpack.c.b16 %v607, %v603
    %v940 = vpack.c.b16 %v612, %v608
    %v941 = vpack.c.b16 %v613, %v609
    %v942 = vpack.c.b16 %v614, %v610
    %v943 = vpack.c.b16 %v615, %v611
    %v944 = vpack.c.b16 %v620, %v616
    %v945 = vpack.c.b16 %v621, %v617
    %v946 = vpack.c.b16 %v622, %v618
    %v947 = vpack.c.b16 %v623, %v619
    %v948 = vpack.c.b16 %v628, %v624
    %v949 = vpack.c.b16 %v629, %v625
    %v950 = vpack.c.b16 %v630, %v626
    %v951 = vpack.c.b16 %v631, %v627
    %v952 = vpack.c.b16 %v636, %v632
    %v953 = vpack.c.b16 %v637, %v633
    %v954 = vpack.c.b16 %v638, %v634
    %v955 = vpack.c.b16 %v639, %v635
    %v956 = vpack.c.b16 %v644, %v640
    %v957 = vpack.c.b16 %v645, %v641
    %v958 = vpack.c.b16 %v646, %v642
    %v959 = vpack.c.b16 %v647, %v643
    %v960 = vpack.c.b16 %v652, %v648
    %v961 = vpack.c.b16 %v653, %v649
    %v962 = vpack.c.b16 %v654, %v650
    %v963 = vpack.c.b16 %v655, %v651
    %v964 = vpack.c.b16 %v660, %v656
    %v965 = vpack.c.b16 %v661, %v657
    %v966 = vpack.c.b16 %v662, %v658
    %v967 = vpack.c.b16 %v663, %v659
    %v968 = vpack.c.b16 %v668, %v664
    %v969 = vpack.c.b16 %v669, %v665
    %v970 = vpack.c.b16 %v670, %v666
    %v971 = vpack.c.b16 %v671, %v667
    %v972 = vpack.c.b16 %v676, %v672
    %v973 = vpack.c.b16 %v677, %v673
    %v974 = vpack.c.b16 %v678, %v674
    %v975 = vpack.c.b16 %v679, %v675
    %v976 = vpack.c.b16 %v684, %v680
    %v977 = vpack.c.b16 %v685, %v681
    %v978 = vpack.c.b16 %v686, %v682
    %v979 = vpack.c.b16 %v687, %v683
    %v980 = vpack.c.b16 %v692, %v688
    %v981 = vpack.c.b16 %v693, %v689
    %v982 = vpack.c.b16 %v694, %v690
    %v983 = vpack.c.b16 %v695, %v691
    %v984 = vpack.c.b16 %v700, %v696
    %v985 = vpack.c.b16 %v701, %v697
    %v986 = vpack.c.b16 %v702, %v698
    %v987 = vpack.c.b16 %v703, %v699
    %v988 = vpack.c.b16 %v708, %v704
    %v989 = vpack.c.b16 %v709, %v705
    %v990 = vpack.c.b16 %v710, %v706
    %v991 = vpack.c.b16 %v711, %v707
    %v992 = vpack.c.b16 %v716, %v712
    %v993 = vpack.c.b16 %v717, %v713
    %v994 = vpack.c.b16 %v718, %v714
    %v995 = vpack.c.b16 %v719, %v715
    %v996 = vpack.c.b16 %v724, %v720
    %v997 = vpack.c.b16 %v725, %v721
    %v998 = vpack.c.b16 %v726, %v722
    %v999 = vpack.c.b16 %v727, %v723
    %v1000 = vpack.c.b16 %v732, %v728
    %v1001 = vpack.c.b16 %v733, %v729
    %v1002 = vpack.c.b16 %v734, %v730
    %v1003 = vpack.c.b16 %v735, %v731
    %v1004 = vpack.c.b16 %v740, %v736
    %v1005 = vpack.c.b16 %v741, %v737
    %v1006 = vpack.c.b16 %v742, %v738
    %v1007 = vpack.c.b16 %v743, %v739
    %v1008 = vpack.c.b16 %v748, %v744
    %v1009 = vpack.c.b16 %v749, %v745
    %v1010 = vpack.c.b16 %v750, %v746
    %v1011 = vpack.c.b16 %v751, %v747
    %v1012 = vpack.c.b16 %v756, %v752
    %v1013 = vpack.c.b16 %v757, %v753
    %v1014 = vpack.c.b16 %v758, %v754
    %v1015 = vpack.c.b16 %v759, %v755
    %v1016 = vpack.c.b16 %v764, %v760
    %v1017 = vpack.c.b16 %v765, %v761
    %v1018 = vpack.c.b16 %v766, %v762
    %v1019 = vpack.c.b16 %v767, %v763
    %v1020 = vpack.c.b16 %v772, %v768
    %v1021 = vpack.c.b16 %v773, %v769
    %v1022 = vpack.c.b16 %v774, %v770
    %v1023 = vpack.c.b16 %v775, %v771
    %v1024 = vpack.c.b16 %v780, %v776
    %v1025 = vpack.c.b16 %v781, %v777
    %v1026 = vpack.c.b16 %v782, %v778
    %v1027 = vpack.c.b16 %v783, %v779
    %v1028 = vpack.c.b16 %v788, %v784
    %v1029 = vpack.c.b16 %v789, %v785
    %v1030 = vpack.c.b16 %v790, %v786
    %v1031 = vpack.c.b16 %v791, %v787
    %v1032 = vpack.c.b16 %v796, %v792
    %v1033 = vpack.c.b16 %v797, %v793
    %v1034 = vpack.c.b16 %v798, %v794
    %v1035 = vpack.c.b16 %v799, %v795
    %v1036 = vpack.c.b16 %v804, %v800
    %v1037 = vpack.c.b16 %v805, %v801
    %v1038 = vpack.c.b16 %v806, %v802
    %v1039 = vpack.c.b16 %v807, %v803
    %v1040 = vpack.c.b16 %v812, %v808
    %v1041 = vpack.c.b16 %v813, %v809
    %v1042 = vpack.c.b16 %v814, %v810
    %v1043 = vpack.c.b16 %v815, %v811
    %v1044 = vpack.c.b16 %v820, %v816
    %v1045 = vpack.c.b16 %v821, %v817
    %v1046 = vpack.c.b16 %v822, %v818
    %v1047 = vpack.c.b16 %v823, %v819
    %v1048 = vpack.c.b16 %v828, %v824
    %v1049 = vpack.c.b16 %v829, %v825
    %v1050 = vpack.c.b16 %v830, %v826
    %v1051 = vpack.c.b16 %v831, %v827
    %v1052 = vpack.c.b16 %v836, %v832
    %v1053 = vpack.c.b16 %v837, %v833
    %v1054 = vpack.c.b16 %v838, %v834
    %v1055 = vpack.c.b16 %v839, %v835
    %v1056 = vpack.c.b16 %v844, %v840
    %v1057 = vpack.c.b16 %v845, %v841
    %v1058 = vpack.c.b16 %v846, %v842
    %v1059 = vpack.c.b16 %v847, %v843
    %v1060 = vpack.c.b16 %v852, %v848
    %v1061 = vpack.c.b16 %v853, %v849
    %v1062 = vpack.c.b16 %v854, %v850
    %v1063 = vpack.c.b16 %v855, %v851
    %v1064 = vpack.c.b16 %v860, %v856
    %v1065 = vpack.c.b16 %v861, %v857
    %v1066 = vpack.c.b16 %v862, %v858
    %v1067 = vpack.c.b16 %v863, %v859
    %v1068 = vpack.c.b16 %v868, %v864
    %v1069 = vpack.c.b16 %v869, %v865
    %v1070 = vpack.c.b16 %v870, %v866
    %v1071 = vpack.c.b16 %v871, %v867
    %v1072 = vpack.c.b16 %v876, %v872
    %v1073 = vpack.c.b16 %v877, %v873
    %v1074 = vpack.c.b16 %v878, %v874
    %v1075 = vpack.c.b16 %v879, %v875
    %vm1272 = vcmask 130048
    %v1274 = vsel %vm1272, %v73, 0
    %1276 = vmatprep.subr.bf16.mxu0 %v881
    %1277 = vmatpush1.bf16.msra.mxu0 %v880
    %1278 = vmatprep.subr.bf16.mxu0 %v885
    %1279 = vmatpush1.bf16.msra.mxu0 %v884
    %1280 = vmatprep.subr.bf16.mxu0 %v889
    %1281 = vmatpush1.bf16.msra.mxu0 %v888
    %1282 = vmatprep.subr.bf16.mxu0 %v893
    %1283 = vmatpush1.bf16.msra.mxu0 %v892
    %1284 = vmatprep.subr.bf16.mxu0 %v897
    %1285 = vmatpush1.bf16.msra.mxu0 %v896
    %1286 = vmatprep.subr.bf16.mxu0 %v901
    %1287 = vmatpush1.bf16.msra.mxu0 %v900
    %1288 = vmatprep.subr.bf16.mxu0 %v905
    %1289 = vmatpush1.bf16.msra.mxu0 %v904
    %1290 = vmatprep.subr.bf16.mxu0 %v909
    %1291 = vmatpush1.bf16.msra.mxu0 %v908
    %1292 = vmatprep.subr.bf16.mxu0 %v913
    %1293 = vmatpush1.bf16.msra.mxu0 %v912
    %1294 = vmatprep.subr.bf16.mxu0 %v917
    %1295 = vmatpush1.bf16.msra.mxu0 %v916
    %1296 = vmatprep.subr.bf16.mxu0 %v921
    %1297 = vmatpush1.bf16.msra.mxu0 %v920
    %1298 = vmatprep.subr.bf16.mxu0 %v925
    %1299 = vmatpush1.bf16.msra.mxu0 %v924
    %1300 = vmatprep.subr.bf16.mxu0 %v929
    %1301 = vmatpush1.bf16.msra.mxu0 %v928
    %1302 = vmatprep.subr.bf16.mxu0 %v933
    %1303 = vmatpush1.bf16.msra.mxu0 %v932
    %1304 = vmatprep.subr.bf16.mxu0 %v937
    %1305 = vmatpush1.bf16.msra.mxu0 %v936
    %1306 = vmatprep.subr.bf16.mxu0 %v941
    %1307 = vmatpush1.bf16.msra.mxu0 %v940
    %1308 = vmatprep.mubr.bf16.mxu0 %v68
    %1309 = vmatmul.mubr.bf16.gmra.mrb[0].mxu0 %v67
    %v1310 = vpop.f32.mrb[0].mxu0
    %v1311 = vadd.f32 %v275, %v1310
    %v1312 = vpop.f32.mrb[0].mxu0
    %v1313 = vadd.f32 %v279, %v1312
    %v1314 = vpop.f32.mrb[0].mxu0
    %v1315 = vadd.f32 %v275, %v1314
    %v1316 = vpop.f32.mrb[0].mxu0
    %v1317 = vadd.f32 %v279, %v1316
    %1318 = vdwg.mxu0
    %1319 = vmatprep.subr.bf16.mxu0 %v945
    %1320 = vmatpush1.bf16.msra.mxu0 %v944
    %1321 = vmatprep.subr.bf16.mxu0 %v949
    %1322 = vmatpush1.bf16.msra.mxu0 %v948
    %1323 = vmatprep.subr.bf16.mxu0 %v953
    %1324 = vmatpush1.bf16.msra.mxu0 %v952
    %1325 = vmatprep.subr.bf16.mxu0 %v957
    %1326 = vmatpush1.bf16.msra.mxu0 %v956
    %1327 = vmatprep.subr.bf16.mxu0 %v961
    %1328 = vmatpush1.bf16.msra.mxu0 %v960
    %1329 = vmatprep.subr.bf16.mxu0 %v965
    %1330 = vmatpush1.bf16.msra.mxu0 %v964
    %1331 = vmatprep.subr.bf16.mxu0 %v969
    %1332 = vmatpush1.bf16.msra.mxu0 %v968
    %1333 = vmatprep.subr.bf16.mxu0 %v973
    %1334 = vmatpush1.bf16.msra.mxu0 %v972
    %1335 = vmatprep.subr.bf16.mxu0 %v977
    %1336 = vmatpush1.bf16.msra.mxu0 %v976
    %1337 = vmatprep.subr.bf16.mxu0 %v981
    %1338 = vmatpush1.bf16.msra.mxu0 %v980
    %1339 = vmatprep.subr.bf16.mxu0 %v985
    %1340 = vmatpush1.bf16.msra.mxu0 %v984
    %1341 = vmatprep.subr.bf16.mxu0 %v989
    %1342 = vmatpush1.bf16.msra.mxu0 %v988
    %1343 = vmatprep.subr.bf16.mxu0 %v993
    %1344 = vmatpush1.bf16.msra.mxu0 %v992
    %1345 = vmatprep.subr.bf16.mxu0 %v997
    %1346 = vmatpush1.bf16.msra.mxu0 %v996
    %1347 = vmatprep.subr.bf16.mxu0 %v1001
    %1348 = vmatpush1.bf16.msra.mxu0 %v1000
    %1349 = vmatprep.subr.bf16.mxu0 %v1005
    %1350 = vmatpush1.bf16.msra.mxu0 %v1004
    %1351 = vmatprep.mubr.bf16.mxu0 %v70
    %1352 = vmatmul.mubr.bf16.gmra.mrb[0].mxu0 %v69
    %v1353 = vpop.f32.mrb[0].mxu0
    %v1354 = vadd.f32 %v1311, %v1353
    %v1355 = vpop.f32.mrb[0].mxu0
    %v1356 = vadd.f32 %v1313, %v1355
    %v1357 = vpop.f32.mrb[0].mxu0
    %v1358 = vadd.f32 %v1315, %v1357
    %v1359 = vpop.f32.mrb[0].mxu0
    %v1360 = vadd.f32 %v1317, %v1359
    %1361 = vdwg.mxu0
    %1362 = vmatprep.subr.bf16.mxu0 %v1009
    %1363 = vmatpush1.bf16.msra.mxu0 %v1008
    %1364 = vmatprep.subr.bf16.mxu0 %v1013
    %1365 = vmatpush1.bf16.msra.mxu0 %v1012
    %1366 = vmatprep.subr.bf16.mxu0 %v1017
    %1367 = vmatpush1.bf16.msra.mxu0 %v1016
    %1368 = vmatprep.subr.bf16.mxu0 %v1021
    %1369 = vmatpush1.bf16.msra.mxu0 %v1020
    %1370 = vmatprep.subr.bf16.mxu0 %v1025
    %1371 = vmatpush1.bf16.msra.mxu0 %v1024
    %1372 = vmatprep.subr.bf16.mxu0 %v1029
    %1373 = vmatpush1.bf16.msra.mxu0 %v1028
    %1374 = vmatprep.subr.bf16.mxu0 %v1033
    %1375 = vmatpush1.bf16.msra.mxu0 %v1032
    %1376 = vmatprep.subr.bf16.mxu0 %v1037
    %1377 = vmatpush1.bf16.msra.mxu0 %v1036
    %1378 = vmatprep.subr.bf16.mxu0 %v1041
    %1379 = vmatpush1.bf16.msra.mxu0 %v1040
    %1380 = vmatprep.subr.bf16.mxu0 %v1045
    %1381 = vmatpush1.bf16.msra.mxu0 %v1044
    %1382 = vmatprep.subr.bf16.mxu0 %v1049
    %1383 = vmatpush1.bf16.msra.mxu0 %v1048
    %1384 = vmatprep.subr.bf16.mxu0 %v1053
    %1385 = vmatpush1.bf16.msra.mxu0 %v1052
    %1386 = vmatprep.subr.bf16.mxu0 %v1057
    %1387 = vmatpush1.bf16.msra.mxu0 %v1056
    %1388 = vmatprep.subr.bf16.mxu0 %v1061
    %1389 = vmatpush1.bf16.msra.mxu0 %v1060
    %1390 = vmatprep.subr.bf16.mxu0 %v1065
    %1391 = vmatpush1.bf16.msra.mxu0 %v1064
    %1392 = vmatprep.subr.bf16.mxu0 %v1069
    %1393 = vmatpush1.bf16.msra.mxu0 %v1068
    %1394 = vmatprep.mubr.bf16.mxu0 %v72
    %1395 = vmatmul.mubr.bf16.gmra.mrb[0].mxu0 %v71
    %v1396 = vpop.f32.mrb[0].mxu0
    %v1397 = vadd.f32 %v1354, %v1396
    %v1398 = vpop.f32.mrb[0].mxu0
    %v1399 = vadd.f32 %v1356, %v1398
    %v1400 = vpop.f32.mrb[0].mxu0
    %v1401 = vadd.f32 %v1358, %v1400
    %v1402 = vpop.f32.mrb[0].mxu0
    %v1403 = vadd.f32 %v1360, %v1402
    %1404 = vdwg.mxu0
    %1405 = vmatprep.subr.bf16.mxu0 %v1073
    %1406 = vmatpush1.bf16.msra.mxu0 %v1072
    %1407 = vmatprep.subr.bf16.mxu0 0
    %1408 = vmatpush1.bf16.msra.mxu0 0
    %1409 = vmatprep.subr.bf16.mxu0 0
    %1410 = vmatpush1.bf16.msra.mxu0 0
    %1411 = vmatprep.subr.bf16.mxu0 0
    %1412 = vmatpush1.bf16.msra.mxu0 0
    %1413 = vmatprep.subr.bf16.mxu0 0
    %1414 = vmatpush1.bf16.msra.mxu0 0
    %1415 = vmatprep.subr.bf16.mxu0 0
    %1416 = vmatpush1.bf16.msra.mxu0 0
    %1417 = vmatprep.subr.bf16.mxu0 0
    %1418 = vmatpush1.bf16.msra.mxu0 0
    %1419 = vmatprep.subr.bf16.mxu0 0
    %1420 = vmatpush1.bf16.msra.mxu0 0
    %1421 = vmatprep.subr.bf16.mxu0 0
    %1422 = vmatpush1.bf16.msra.mxu0 0
    %1423 = vmatprep.subr.bf16.mxu0 0
    %1424 = vmatpush1.bf16.msra.mxu0 0
    %1425 = vmatprep.subr.bf16.mxu0 0
    %1426 = vmatpush1.bf16.msra.mxu0 0
    %1427 = vmatprep.subr.bf16.mxu0 0
    %1428 = vmatpush1.bf16.msra.mxu0 0
    %1429 = vmatprep.subr.bf16.mxu0 0
    %1430 = vmatpush1.bf16.msra.mxu0 0
    %1431 = vmatprep.subr.bf16.mxu0 0
    %1432 = vmatpush1.bf16.msra.mxu0 0
    %1433 = vmatprep.subr.bf16.mxu0 0
    %1434 = vmatpush1.bf16.msra.mxu0 0
    %1435 = vmatprep.subr.bf16.mxu0 0
    %1436 = vmatpush1.bf16.msra.mxu0 0
    %1437 = vmatprep.mubr.bf16.mxu0 0
    %1438 = vmatmul.mubr.bf16.gmra.mrb[0].mxu0 %v1274
    %v1439 = vpop.f32.mrb[0].mxu0
    %v1440 = vadd.f32 %v1397, %v1439
    %v1441 = vpop.f32.mrb[0].mxu0
    %v1442 = vadd.f32 %v1399, %v1441
    %v1443 = vpop.f32.mrb[0].mxu0
    %v1444 = vadd.f32 %v1401, %v1443
    %v1445 = vpop.f32.mrb[0].mxu0
    %v1446 = vadd.f32 %v1403, %v1445
    %1447 = vdwg.mxu0
    %1448 = vmatprep.subr.bf16.mxu0 %v883
    %1449 = vmatpush1.bf16.msra.mxu0 %v882
    %1450 = vmatprep.subr.bf16.mxu0 %v887
    %1451 = vmatpush1.bf16.msra.mxu0 %v886
    %1452 = vmatprep.subr.bf16.mxu0 %v891
    %1453 = vmatpush1.bf16.msra.mxu0 %v890
    %1454 = vmatprep.subr.bf16.mxu0 %v895
    %1455 = vmatpush1.bf16.msra.mxu0 %v894
    %1456 = vmatprep.subr.bf16.mxu0 %v899
    %1457 = vmatpush1.bf16.msra.mxu0 %v898
    %1458 = vmatprep.subr.bf16.mxu0 %v903
    %1459 = vmatpush1.bf16.msra.mxu0 %v902
    %1460 = vmatprep.subr.bf16.mxu0 %v907
    %1461 = vmatpush1.bf16.msra.mxu0 %v906
    %1462 = vmatprep.subr.bf16.mxu0 %v911
    %1463 = vmatpush1.bf16.msra.mxu0 %v910
    %1464 = vmatprep.subr.bf16.mxu0 %v915
    %1465 = vmatpush1.bf16.msra.mxu0 %v914
    %1466 = vmatprep.subr.bf16.mxu0 %v919
    %1467 = vmatpush1.bf16.msra.mxu0 %v918
    %1468 = vmatprep.subr.bf16.mxu0 %v923
    %1469 = vmatpush1.bf16.msra.mxu0 %v922
    %1470 = vmatprep.subr.bf16.mxu0 %v927
    %1471 = vmatpush1.bf16.msra.mxu0 %v926
    %1472 = vmatprep.subr.bf16.mxu0 %v931
    %1473 = vmatpush1.bf16.msra.mxu0 %v930
    %1474 = vmatprep.subr.bf16.mxu0 %v935
    %1475 = vmatpush1.bf16.msra.mxu0 %v934
    %1476 = vmatprep.subr.bf16.mxu0 %v939
    %1477 = vmatpush1.bf16.msra.mxu0 %v938
    %1478 = vmatprep.subr.bf16.mxu0 %v943
    %1479 = vmatpush1.bf16.msra.mxu0 %v942
    %1480 = vmatprep.mubr.bf16.mxu0 %v68
    %1481 = vmatmul.mubr.bf16.gmra.mrb[0].mxu0 %v67
    %v1482 = vpop.f32.mrb[0].mxu0
    %v1483 = vadd.f32 %v283, %v1482
    %v1484 = vpop.f32.mrb[0].mxu0
    %v1485 = vadd.f32 %v287, %v1484
    %v1486 = vpop.f32.mrb[0].mxu0
    %v1487 = vadd.f32 %v283, %v1486
    %v1488 = vpop.f32.mrb[0].mxu0
    %v1489 = vadd.f32 %v287, %v1488
    %1490 = vdwg.mxu0
    %1491 = vmatprep.subr.bf16.mxu0 %v947
    %1492 = vmatpush1.bf16.msra.mxu0 %v946
    %1493 = vmatprep.subr.bf16.mxu0 %v951
    %1494 = vmatpush1.bf16.msra.mxu0 %v950
    %1495 = vmatprep.subr.bf16.mxu0 %v955
    %1496 = vmatpush1.bf16.msra.mxu0 %v954
    %1497 = vmatprep.subr.bf16.mxu0 %v959
    %1498 = vmatpush1.bf16.msra.mxu0 %v958
    %1499 = vmatprep.subr.bf16.mxu0 %v963
    %1500 = vmatpush1.bf16.msra.mxu0 %v962
    %1501 = vmatprep.subr.bf16.mxu0 %v967
    %1502 = vmatpush1.bf16.msra.mxu0 %v966
    %1503 = vmatprep.subr.bf16.mxu0 %v971
    %1504 = vmatpush1.bf16.msra.mxu0 %v970
    %1505 = vmatprep.subr.bf16.mxu0 %v975
    %1506 = vmatpush1.bf16.msra.mxu0 %v974
    %1507 = vmatprep.subr.bf16.mxu0 %v979
    %1508 = vmatpush1.bf16.msra.mxu0 %v978
    %1509 = vmatprep.subr.bf16.mxu0 %v983
    %1510 = vmatpush1.bf16.msra.mxu0 %v982
    %1511 = vmatprep.subr.bf16.mxu0 %v987
    %1512 = vmatpush1.bf16.msra.mxu0 %v986
    %1513 = vmatprep.subr.bf16.mxu0 %v991
    %1514 = vmatpush1.bf16.msra.mxu0 %v990
    %1515 = vmatprep.subr.bf16.mxu0 %v995
    %1516 = vmatpush1.bf16.msra.mxu0 %v994
    %1517 = vmatprep.subr.bf16.mxu0 %v999
    %1518 = vmatpush1.bf16.msra.mxu0 %v998
    %1519 = vmatprep.subr.bf16.mxu0 %v1003
    %1520 = vmatpush1.bf16.msra.mxu0 %v1002
    %1521 = vmatprep.subr.bf16.mxu0 %v1007
    %1522 = vmatpush1.bf16.msra.mxu0 %v1006
    %1523 = vmatprep.mubr.bf16.mxu0 %v70
    %1524 = vmatmul.mubr.bf16.gmra.mrb[0].mxu0 %v69
    %v1525 = vpop.f32.mrb[0].mxu0
    %v1526 = vadd.f32 %v1483, %v1525
    %v1527 = vpop.f32.mrb[0].mxu0
    %v1528 = vadd.f32 %v1485, %v1527
    %v1529 = vpop.f32.mrb[0].mxu0
    %v1530 = vadd.f32 %v1487, %v1529
    %v1531 = vpop.f32.mrb[0].mxu0
    %v1532 = vadd.f32 %v1489, %v1531
    %1533 = vdwg.mxu0
    %1534 = vmatprep.subr.bf16.mxu0 %v1011
    %1535 = vmatpush1.bf16.msra.mxu0 %v1010
    %1536 = vmatprep.subr.bf16.mxu0 %v1015
    %1537 = vmatpush1.bf16.msra.mxu0 %v1014
    %1538 = vmatprep.subr.bf16.mxu0 %v1019
    %1539 = vmatpush1.bf16.msra.mxu0 %v1018
    %1540 = vmatprep.subr.bf16.mxu0 %v1023
    %1541 = vmatpush1.bf16.msra.mxu0 %v1022
    %1542 = vmatprep.subr.bf16.mxu0 %v1027
    %1543 = vmatpush1.bf16.msra.mxu0 %v1026
    %1544 = vmatprep.subr.bf16.mxu0 %v1031
    %1545 = vmatpush1.bf16.msra.mxu0 %v1030
    %1546 = vmatprep.subr.bf16.mxu0 %v1035
    %1547 = vmatpush1.bf16.msra.mxu0 %v1034
    %1548 = vmatprep.subr.bf16.mxu0 %v1039
    %1549 = vmatpush1.bf16.msra.mxu0 %v1038
    %1550 = vmatprep.subr.bf16.mxu0 %v1043
    %1551 = vmatpush1.bf16.msra.mxu0 %v1042
    %1552 = vmatprep.subr.bf16.mxu0 %v1047
    %1553 = vmatpush1.bf16.msra.mxu0 %v1046
    %1554 = vmatprep.subr.bf16.mxu0 %v1051
    %1555 = vmatpush1.bf16.msra.mxu0 %v1050
    %1556 = vmatprep.subr.bf16.mxu0 %v1055
    %1557 = vmatpush1.bf16.msra.mxu0 %v1054
    %1558 = vmatprep.subr.bf16.mxu0 %v1059
    %1559 = vmatpush1.bf16.msra.mxu0 %v1058
    %1560 = vmatprep.subr.bf16.mxu0 %v1063
    %1561 = vmatpush1.bf16.msra.mxu0 %v1062
    %1562 = vmatprep.subr.bf16.mxu0 %v1067
    %1563 = vmatpush1.bf16.msra.mxu0 %v1066
    %1564 = vmatprep.subr.bf16.mxu0 %v1071
    %1565 = vmatpush1.bf16.msra.mxu0 %v1070
    %1566 = vmatprep.mubr.bf16.mxu0 %v72
    %1567 = vmatmul.mubr.bf16.gmra.mrb[0].mxu0 %v71
    %v1568 = vpop.f32.mrb[0].mxu0
    %v1569 = vadd.f32 %v1526, %v1568
    %v1570 = vpop.f32.mrb[0].mxu0
    %v1571 = vadd.f32 %v1528, %v1570
    %v1572 = vpop.f32.mrb[0].mxu0
    %v1573 = vadd.f32 %v1530, %v1572
    %v1574 = vpop.f32.mrb[0].mxu0
    %v1575 = vadd.f32 %v1532, %v1574
    %1576 = vdwg.mxu0
    %1577 = vmatprep.subr.bf16.mxu0 %v1075
    %1578 = vmatpush1.bf16.msra.mxu0 %v1074
    %1579 = vmatprep.subr.bf16.mxu0 0
    %1580 = vmatpush1.bf16.msra.mxu0 0
    %1581 = vmatprep.subr.bf16.mxu0 0
    %1582 = vmatpush1.bf16.msra.mxu0 0
    %1583 = vmatprep.subr.bf16.mxu0 0
    %1584 = vmatpush1.bf16.msra.mxu0 0
    %1585 = vmatprep.subr.bf16.mxu0 0
    %1586 = vmatpush1.bf16.msra.mxu0 0
    %1587 = vmatprep.subr.bf16.mxu0 0
    %1588 = vmatpush1.bf16.msra.mxu0 0
    %1589 = vmatprep.subr.bf16.mxu0 0
    %1590 = vmatpush1.bf16.msra.mxu0 0
    %1591 = vmatprep.subr.bf16.mxu0 0
    %1592 = vmatpush1.bf16.msra.mxu0 0
    %1593 = vmatprep.subr.bf16.mxu0 0
    %1594 = vmatpush1.bf16.msra.mxu0 0
    %1595 = vmatprep.subr.bf16.mxu0 0
    %1596 = vmatpush1.bf16.msra.mxu0 0
    %1597 = vmatprep.subr.bf16.mxu0 0
    %1598 = vmatpush1.bf16.msra.mxu0 0
    %1599 = vmatprep.subr.bf16.mxu0 0
    %1600 = vmatpush1.bf16.msra.mxu0 0
    %1601 = vmatprep.subr.bf16.mxu0 0
    %1602 = vmatpush1.bf16.msra.mxu0 0
    %1603 = vmatprep.subr.bf16.mxu0 0
    %1604 = vmatpush1.bf16.msra.mxu0 0
    %1605 = vmatprep.subr.bf16.mxu0 0
    %1606 = vmatpush1.bf16.msra.mxu0 0
    %1607 = vmatprep.subr.bf16.mxu0 0
    %1608 = vmatpush1.bf16.msra.mxu0 0
    %1609 = vmatprep.mubr.bf16.mxu0 0
    %1610 = vmatmul.mubr.bf16.gmra.mrb[0].mxu0 %v1274
    %v1611 = vpop.f32.mrb[0].mxu0
    %v1612 = vadd.f32 %v1569, %v1611
    %v1613 = vpop.f32.mrb[0].mxu0
    %v1614 = vadd.f32 %v1571, %v1613
    %v1615 = vpop.f32.mrb[0].mxu0
    %v1616 = vadd.f32 %v1573, %v1615
    %v1617 = vpop.f32.mrb[0].mxu0
    %v1618 = vadd.f32 %v1575, %v1617
    %1619 = vdwg.mxu0
    %v1620 = vpack.c.bf16 %v1444, %v1440
    %v1621 = vpack.c.bf16 %v1446, %v1442
    %v1622 = vpack.c.bf16 %v1616, %v1612
    %v1623 = vpack.c.bf16 %v1618, %v1614
    %v1624 = vmax.bf16 %v1620, 0
    %v1625 = vmax.bf16 %v1621, 0
    %v1626 = vmax.bf16 %v1622, 0
    %v1627 = vmax.bf16 %v1623, 0
    %v1628 = vld [vmem:[%s3] sm:$0xff]
    %v1629 = vld [vmem:[%s3 + $0x8] sm:$0xff]
    %v1630 = vld [vmem:[%s3 + $0x10] sm:$0xff]
    %v1631 = vld [vmem:[%s3 + $0x18] sm:$0xff]
    %v1632 = vld [vmem:[%s3 + $0x20] sm:$0xff]
    %v1633 = vld [vmem:[%s3 + $0x28] sm:$0xff]
    %v1634 = vld [vmem:[%s3 + $0x30] sm:$0xff]
    %v1635 = vld [vmem:[%s3 + $0x38] sm:$0xff]
    %v1636 = vld [vmem:[%s3 + $0x40] sm:$0xff]
    %v1637 = vld [vmem:[%s3 + $0x48] sm:$0xff]
    %v1638 = vld [vmem:[%s3 + $0x50] sm:$0xff]
    %v1639 = vld [vmem:[%s3 + $0x58] sm:$0xff]
    %v1640 = vld [vmem:[%s3 + $0x60] sm:$0xff]
    %v1641 = vld [vmem:[%s3 + $0x68] sm:$0xff]
    %v1642 = vld [vmem:[%s3 + $0x70] sm:$0xff]
    %v1643 = vld [vmem:[%s3 + $0x78] sm:$0xff]
    %v1644 = vld [vmem:[%s3 + $0x80] sm:$0xff]
    %v1645 = vld [vmem:[%s3 + $0x88] sm:$0xff]
    %v1646 = vld [vmem:[%s3 + $0x90] sm:$0xff]
    %v1647 = vld [vmem:[%s3 + $0x98] sm:$0xff]
    %v1648 = vld [vmem:[%s3 + $0xa0] sm:$0xff]
    %v1649 = vld [vmem:[%s3 + $0xa8] sm:$0xff]
    %v1650 = vld [vmem:[%s3 + $0xb0] sm:$0xff]
    %v1651 = vld [vmem:[%s3 + $0xb8] sm:$0xff]
    %v1652 = vld [vmem:[%s3 + $0xc0] sm:$0xff]
    %v1653 = vld [vmem:[%s3 + $0xc8] sm:$0xff]
    %v1654 = vld [vmem:[%s3 + $0xd0] sm:$0xff]
    %v1655 = vld [vmem:[%s3 + $0xd8] sm:$0xff]
    %v1656 = vld [vmem:[%s3 + $0xe0] sm:$0xff]
    %v1657 = vld [vmem:[%s3 + $0xe8] sm:$0xff]
    %v1658 = vld [vmem:[%s3 + $0xf0] sm:$0xff]
    %v1659 = vld [vmem:[%s3 + $0xf8] sm:$0xff]
    %v1660 = vld [vmem:[%s3 + $0x100] sm:$0xff]
    %v1661 = vld [vmem:[%s3 + $0x108] sm:$0xff]
    %v1662 = vld [vmem:[%s3 + $0x110] sm:$0xff]
    %v1663 = vld [vmem:[%s3 + $0x118] sm:$0xff]
    %v1664 = vld [vmem:[%s3 + $0x120] sm:$0xff]
    %v1665 = vld [vmem:[%s3 + $0x128] sm:$0xff]
    %v1666 = vld [vmem:[%s3 + $0x130] sm:$0xff]
    %v1667 = vld [vmem:[%s3 + $0x138] sm:$0xff]
    %v1668 = vld [vmem:[%s3 + $0x140] sm:$0xff]
    %v1669 = vld [vmem:[%s3 + $0x148] sm:$0xff]
    %v1670 = vld [vmem:[%s3 + $0x150] sm:$0xff]
    %v1671 = vld [vmem:[%s3 + $0x158] sm:$0xff]
    %v1672 = vld [vmem:[%s3 + $0x160] sm:$0xff]
    %v1673 = vld [vmem:[%s3 + $0x168] sm:$0xff]
    %v1674 = vld [vmem:[%s3 + $0x170] sm:$0xff]
    %v1675 = vld [vmem:[%s3 + $0x178] sm:$0xff]
    %v1676 = vld [vmem:[%s3 + $0x180] sm:$0xff]
    %v1677 = vld [vmem:[%s3 + $0x188] sm:$0xff]
    %v1678 = vld [vmem:[%s3 + $0x190] sm:$0xff]
    %v1679 = vld [vmem:[%s3 + $0x198] sm:$0xff]
    %v1680 = vld [vmem:[%s3 + $0x1a0] sm:$0xff]
    %v1681 = vld [vmem:[%s3 + $0x1a8] sm:$0xff]
    %v1682 = vld [vmem:[%s3 + $0x1b0] sm:$0xff]
    %v1683 = vld [vmem:[%s3 + $0x1b8] sm:$0xff]
    %v1684 = vld [vmem:[%s3 + $0x1c0] sm:$0xff]
    %v1685 = vld [vmem:[%s3 + $0x1c8] sm:$0xff]
    %v1686 = vld [vmem:[%s3 + $0x1d0] sm:$0xff]
    %v1687 = vld [vmem:[%s3 + $0x1d8] sm:$0xff]
    %v1688 = vld [vmem:[%s3 + $0x1e0] sm:$0xff]
    %v1689 = vld [vmem:[%s3 + $0x1e8] sm:$0xff]
    %v1690 = vld [vmem:[%s3 + $0x1f0] sm:$0xff]
    %v1691 = vld [vmem:[%s3 + $0x1f8] sm:$0xff]
    %v1692 = vld [vmem:[%s4] sm:$0x3]
    %v1694 = vlaneseq
    %v1695 = vshrl.u32 %v1694, 7
    %v1696 = vsub.s32 0, %v1695
    %v1697 = vrot.slane %v1692, %v1696
    %v1698 = vlaneseq
    %v1699 = vshrl.u32 %v1698, 7
    %v1700 = vsub.s32 1, %v1699
    %v1701 = vrot.slane %v1692, %v1700
    %v1768 = vunpack.c.l.b16 %v1628
    %v1769 = vunpack.c.h.b16 %v1628
    %v1770 = vunpack.c.l.b16 %v1629
    %v1771 = vunpack.c.h.b16 %v1629
    %v1772 = vunpack.c.l.b16 %v1630
    %v1773 = vunpack.c.h.b16 %v1630
    %v1774 = vunpack.c.l.b16 %v1631
    %v1775 = vunpack.c.h.b16 %v1631
    %v1776 = vunpack.c.l.b16 %v1632
    %v1777 = vunpack.c.h.b16 %v1632
    %v1778 = vunpack.c.l.b16 %v1633
    %v1779 = vunpack.c.h.b16 %v1633
    %v1780 = vunpack.c.l.b16 %v1634
    %v1781 = vunpack.c.h.b16 %v1634
    %v1782 = vunpack.c.l.b16 %v1635
    %v1783 = vunpack.c.h.b16 %v1635
    %v1784 = vunpack.c.l.b16 %v1636
    %v1785 = vunpack.c.h.b16 %v1636
    %v1786 = vunpack.c.l.b16 %v1637
    %v1787 = vunpack.c.h.b16 %v1637
    %v1788 = vunpack.c.l.b16 %v1638
    %v1789 = vunpack.c.h.b16 %v1638
    %v1790 = vunpack.c.l.b16 %v1639
    %v1791 = vunpack.c.h.b16 %v1639
    %v1792 = vunpack.c.l.b16 %v1640
    %v1793 = vunpack.c.h.b16 %v1640
    %v1794 = vunpack.c.l.b16 %v1641
    %v1795 = vunpack.c.h.b16 %v1641
    %v1796 = vunpack.c.l.b16 %v1642
    %v1797 = vunpack.c.h.b16 %v1642
    %v1798 = vunpack.c.l.b16 %v1643
    %v1799 = vunpack.c.h.b16 %v1643
    %v1800 = vunpack.c.l.b16 %v1644
    %v1801 = vunpack.c.h.b16 %v1644
    %v1802 = vunpack.c.l.b16 %v1645
    %v1803 = vunpack.c.h.b16 %v1645
    %v1804 = vunpack.c.l.b16 %v1646
    %v1805 = vunpack.c.h.b16 %v1646
    %v1806 = vunpack.c.l.b16 %v1647
    %v1807 = vunpack.c.h.b16 %v1647
    %v1808 = vunpack.c.l.b16 %v1648
    %v1809 = vunpack.c.h.b16 %v1648
    %v1810 = vunpack.c.l.b16 %v1649
    %v1811 = vunpack.c.h.b16 %v1649
    %v1812 = vunpack.c.l.b16 %v1650
    %v1813 = vunpack.c.h.b16 %v1650
    %v1814 = vunpack.c.l.b16 %v1651
    %v1815 = vunpack.c.h.b16 %v1651
    %v1816 = vunpack.c.l.b16 %v1652
    %v1817 = vunpack.c.h.b16 %v1652
    %v1818 = vunpack.c.l.b16 %v1653
    %v1819 = vunpack.c.h.b16 %v1653
    %v1820 = vunpack.c.l.b16 %v1654
    %v1821 = vunpack.c.h.b16 %v1654
    %v1822 = vunpack.c.l.b16 %v1655
    %v1823 = vunpack.c.h.b16 %v1655
    %v1824 = vunpack.c.l.b16 %v1656
    %v1825 = vunpack.c.h.b16 %v1656
    %v1826 = vunpack.c.l.b16 %v1657
    %v1827 = vunpack.c.h.b16 %v1657
    %v1828 = vunpack.c.l.b16 %v1658
    %v1829 = vunpack.c.h.b16 %v1658
    %v1830 = vunpack.c.l.b16 %v1659
    %v1831 = vunpack.c.h.b16 %v1659
    %v1832 = vunpack.c.l.b16 %v1660
    %v1833 = vunpack.c.h.b16 %v1660
    %v1834 = vunpack.c.l.b16 %v1661
    %v1835 = vunpack.c.h.b16 %v1661
    %v1836 = vunpack.c.l.b16 %v1662
    %v1837 = vunpack.c.h.b16 %v1662
    %v1838 = vunpack.c.l.b16 %v1663
    %v1839 = vunpack.c.h.b16 %v1663
    %v1840 = vunpack.c.l.b16 %v1664
    %v1841 = vunpack.c.h.b16 %v1664
    %v1842 = vunpack.c.l.b16 %v1665
    %v1843 = vunpack.c.h.b16 %v1665
    %v1844 = vunpack.c.l.b16 %v1666
    %v1845 = vunpack.c.h.b16 %v1666
    %v1846 = vunpack.c.l.b16 %v1667
    %v1847 = vunpack.c.h.b16 %v1667
    %v1848 = vunpack.c.l.b16 %v1668
    %v1849 = vunpack.c.h.b16 %v1668
    %v1850 = vunpack.c.l.b16 %v1669
    %v1851 = vunpack.c.h.b16 %v1669
    %v1852 = vunpack.c.l.b16 %v1670
    %v1853 = vunpack.c.h.b16 %v1670
    %v1854 = vunpack.c.l.b16 %v1671
    %v1855 = vunpack.c.h.b16 %v1671
    %v1856 = vunpack.c.l.b16 %v1672
    %v1857 = vunpack.c.h.b16 %v1672
    %v1858 = vunpack.c.l.b16 %v1673
    %v1859 = vunpack.c.h.b16 %v1673
    %v1860 = vunpack.c.l.b16 %v1674
    %v1861 = vunpack.c.h.b16 %v1674
    %v1862 = vunpack.c.l.b16 %v1675
    %v1863 = vunpack.c.h.b16 %v1675
    %v1864 = vunpack.c.l.b16 %v1676
    %v1865 = vunpack.c.h.b16 %v1676
    %v1866 = vunpack.c.l.b16 %v1677
    %v1867 = vunpack.c.h.b16 %v1677
    %v1868 = vunpack.c.l.b16 %v1678
    %v1869 = vunpack.c.h.b16 %v1678
    %v1870 = vunpack.c.l.b16 %v1679
    %v1871 = vunpack.c.h.b16 %v1679
    %v1872 = vunpack.c.l.b16 %v1680
    %v1873 = vunpack.c.h.b16 %v1680
    %v1874 = vunpack.c.l.b16 %v1681
    %v1875 = vunpack.c.h.b16 %v1681
    %v1876 = vunpack.c.l.b16 %v1682
    %v1877 = vunpack.c.h.b16 %v1682
    %v1878 = vunpack.c.l.b16 %v1683
    %v1879 = vunpack.c.h.b16 %v1683
    %v1880 = vunpack.c.l.b16 %v1684
    %v1881 = vunpack.c.h.b16 %v1684
    %v1882 = vunpack.c.l.b16 %v1685
    %v1883 = vunpack.c.h.b16 %v1685
    %v1884 = vunpack.c.l.b16 %v1686
    %v1885 = vunpack.c.h.b16 %v1686
    %v1886 = vunpack.c.l.b16 %v1687
    %v1887 = vunpack.c.h.b16 %v1687
    %v1888 = vunpack.c.l.b16 %v1688
    %v1889 = vunpack.c.h.b16 %v1688
    %v1890 = vunpack.c.l.b16 %v1689
    %v1891 = vunpack.c.h.b16 %v1689
    %v1892 = vunpack.c.l.b16 %v1690
    %v1893 = vunpack.c.h.b16 %v1690
    %v1894 = vunpack.c.l.b16 %v1691
    %v1895 = vunpack.c.h.b16 %v1691
    %v1896 = vpack.c.b16 %v1770, %v1768
    %v1897 = vpack.c.b16 %v1771, %v1769
    %v1898 = vpack.c.b16 %v1774, %v1772
    %v1899 = vpack.c.b16 %v1775, %v1773
    %v1900 = vpack.c.b16 %v1778, %v1776
    %v1901 = vpack.c.b16 %v1779, %v1777
    %v1902 = vpack.c.b16 %v1782, %v1780
    %v1903 = vpack.c.b16 %v1783, %v1781
    %v1904 = vpack.c.b16 %v1786, %v1784
    %v1905 = vpack.c.b16 %v1787, %v1785
    %v1906 = vpack.c.b16 %v1790, %v1788
    %v1907 = vpack.c.b16 %v1791, %v1789
    %v1908 = vpack.c.b16 %v1794, %v1792
    %v1909 = vpack.c.b16 %v1795, %v1793
    %v1910 = vpack.c.b16 %v1798, %v1796
    %v1911 = vpack.c.b16 %v1799, %v1797
    %v1912 = vpack.c.b16 %v1802, %v1800
    %v1913 = vpack.c.b16 %v1803, %v1801
    %v1914 = vpack.c.b16 %v1806, %v1804
    %v1915 = vpack.c.b16 %v1807, %v1805
    %v1916 = vpack.c.b16 %v1810, %v1808
    %v1917 = vpack.c.b16 %v1811, %v1809
    %v1918 = vpack.c.b16 %v1814, %v1812
    %v1919 = vpack.c.b16 %v1815, %v1813
    %v1920 = vpack.c.b16 %v1818, %v1816
    %v1921 = vpack.c.b16 %v1819, %v1817
    %v1922 = vpack.c.b16 %v1822, %v1820
    %v1923 = vpack.c.b16 %v1823, %v1821
    %v1924 = vpack.c.b16 %v1826, %v1824
    %v1925 = vpack.c.b16 %v1827, %v1825
    %v1926 = vpack.c.b16 %v1830, %v1828
    %v1927 = vpack.c.b16 %v1831, %v1829
    %v1928 = vpack.c.b16 %v1834, %v1832
    %v1929 = vpack.c.b16 %v1835, %v1833
    %v1930 = vpack.c.b16 %v1838, %v1836
    %v1931 = vpack.c.b16 %v1839, %v1837
    %v1932 = vpack.c.b16 %v1842, %v1840
    %v1933 = vpack.c.b16 %v1843, %v1841
    %v1934 = vpack.c.b16 %v1846, %v1844
    %v1935 = vpack.c.b16 %v1847, %v1845
    %v1936 = vpack.c.b16 %v1850, %v1848
    %v1937 = vpack.c.b16 %v1851, %v1849
    %v1938 = vpack.c.b16 %v1854, %v1852
    %v1939 = vpack.c.b16 %v1855, %v1853
    %v1940 = vpack.c.b16 %v1858, %v1856
    %v1941 = vpack.c.b16 %v1859, %v1857
    %v1942 = vpack.c.b16 %v1862, %v1860
    %v1943 = vpack.c.b16 %v1863, %v1861
    %v1944 = vpack.c.b16 %v1866, %v1864
    %v1945 = vpack.c.b16 %v1867, %v1865
    %v1946 = vpack.c.b16 %v1870, %v1868
    %v1947 = vpack.c.b16 %v1871, %v1869
    %v1948 = vpack.c.b16 %v1874, %v1872
    %v1949 = vpack.c.b16 %v1875, %v1873
    %v1950 = vpack.c.b16 %v1878, %v1876
    %v1951 = vpack.c.b16 %v1879, %v1877
    %v1952 = vpack.c.b16 %v1882, %v1880
    %v1953 = vpack.c.b16 %v1883, %v1881
    %v1954 = vpack.c.b16 %v1886, %v1884
    %v1955 = vpack.c.b16 %v1887, %v1885
    %v1956 = vpack.c.b16 %v1890, %v1888
    %v1957 = vpack.c.b16 %v1891, %v1889
    %v1958 = vpack.c.b16 %v1894, %v1892
    %v1959 = vpack.c.b16 %v1895, %v1893
    %2024 = vmatprep.subr.bf16.mxu0 %v1897
    %2025 = vmatpush1.bf16.msra.mxu0 %v1896
    %2026 = vmatprep.subr.bf16.mxu0 %v1899
    %2027 = vmatpush1.bf16.msra.mxu0 %v1898
    %2028 = vmatprep.subr.bf16.mxu0 %v1901
    %2029 = vmatpush1.bf16.msra.mxu0 %v1900
    %2030 = vmatprep.subr.bf16.mxu0 %v1903
    %2031 = vmatpush1.bf16.msra.mxu0 %v1902
    %2032 = vmatprep.subr.bf16.mxu0 %v1905
    %2033 = vmatpush1.bf16.msra.mxu0 %v1904
    %2034 = vmatprep.subr.bf16.mxu0 %v1907
    %2035 = vmatpush1.bf16.msra.mxu0 %v1906
    %2036 = vmatprep.subr.bf16.mxu0 %v1909
    %2037 = vmatpush1.bf16.msra.mxu0 %v1908
    %2038 = vmatprep.subr.bf16.mxu0 %v1911
    %2039 = vmatpush1.bf16.msra.mxu0 %v1910
    %2040 = vmatprep.subr.bf16.mxu0 %v1913
    %2041 = vmatpush1.bf16.msra.mxu0 %v1912
    %2042 = vmatprep.subr.bf16.mxu0 %v1915
    %2043 = vmatpush1.bf16.msra.mxu0 %v1914
    %2044 = vmatprep.subr.bf16.mxu0 %v1917
    %2045 = vmatpush1.bf16.msra.mxu0 %v1916
    %2046 = vmatprep.subr.bf16.mxu0 %v1919
    %2047 = vmatpush1.bf16.msra.mxu0 %v1918
    %2048 = vmatprep.subr.bf16.mxu0 %v1921
    %2049 = vmatpush1.bf16.msra.mxu0 %v1920
    %2050 = vmatprep.subr.bf16.mxu0 %v1923
    %2051 = vmatpush1.bf16.msra.mxu0 %v1922
    %2052 = vmatprep.subr.bf16.mxu0 %v1925
    %2053 = vmatpush1.bf16.msra.mxu0 %v1924
    %2054 = vmatprep.subr.bf16.mxu0 %v1927
    %2055 = vmatpush1.bf16.msra.mxu0 %v1926
    %2056 = vmatprep.mubr.bf16.mxu0 %v1625
    %2057 = vmatmul.mubr.bf16.gmra.mrb[0].mxu0 %v1624
    %v2058 = vpop.f32.mrb[0].mxu0
    %v2059 = vadd.f32 %v1697, %v2058
    %v2060 = vpop.f32.mrb[0].mxu0
    %v2061 = vadd.f32 %v1701, %v2060
    %v2062 = vpop.f32.mrb[0].mxu0
    %v2063 = vadd.f32 %v1697, %v2062
    %v2064 = vpop.f32.mrb[0].mxu0
    %v2065 = vadd.f32 %v1701, %v2064
    %2066 = vdwg.mxu0
    %2067 = vmatprep.subr.bf16.mxu0 %v1929
    %2068 = vmatpush1.bf16.msra.mxu0 %v1928
    %2069 = vmatprep.subr.bf16.mxu0 %v1931
    %2070 = vmatpush1.bf16.msra.mxu0 %v1930
    %2071 = vmatprep.subr.bf16.mxu0 %v1933
    %2072 = vmatpush1.bf16.msra.mxu0 %v1932
    %2073 = vmatprep.subr.bf16.mxu0 %v1935
    %2074 = vmatpush1.bf16.msra.mxu0 %v1934
    %2075 = vmatprep.subr.bf16.mxu0 %v1937
    %2076 = vmatpush1.bf16.msra.mxu0 %v1936
    %2077 = vmatprep.subr.bf16.mxu0 %v1939
    %2078 = vmatpush1.bf16.msra.mxu0 %v1938
    %2079 = vmatprep.subr.bf16.mxu0 %v1941
    %2080 = vmatpush1.bf16.msra.mxu0 %v1940
    %2081 = vmatprep.subr.bf16.mxu0 %v1943
    %2082 = vmatpush1.bf16.msra.mxu0 %v1942
    %2083 = vmatprep.subr.bf16.mxu0 %v1945
    %2084 = vmatpush1.bf16.msra.mxu0 %v1944
    %2085 = vmatprep.subr.bf16.mxu0 %v1947
    %2086 = vmatpush1.bf16.msra.mxu0 %v1946
    %2087 = vmatprep.subr.bf16.mxu0 %v1949
    %2088 = vmatpush1.bf16.msra.mxu0 %v1948
    %2089 = vmatprep.subr.bf16.mxu0 %v1951
    %2090 = vmatpush1.bf16.msra.mxu0 %v1950
    %2091 = vmatprep.subr.bf16.mxu0 %v1953
    %2092 = vmatpush1.bf16.msra.mxu0 %v1952
    %2093 = vmatprep.subr.bf16.mxu0 %v1955
    %2094 = vmatpush1.bf16.msra.mxu0 %v1954
    %2095 = vmatprep.subr.bf16.mxu0 %v1957
    %2096 = vmatpush1.bf16.msra.mxu0 %v1956
    %2097 = vmatprep.subr.bf16.mxu0 %v1959
    %2098 = vmatpush1.bf16.msra.mxu0 %v1958
    %2099 = vmatprep.mubr.bf16.mxu0 %v1627
    %2100 = vmatmul.mubr.bf16.gmra.mrb[0].mxu0 %v1626
    %v2101 = vpop.f32.mrb[0].mxu0
    %v2102 = vadd.f32 %v2059, %v2101
    %v2103 = vpop.f32.mrb[0].mxu0
    %v2104 = vadd.f32 %v2061, %v2103
    %v2105 = vpop.f32.mrb[0].mxu0
    %v2106 = vadd.f32 %v2063, %v2105
    %v2107 = vpop.f32.mrb[0].mxu0
    %v2108 = vadd.f32 %v2065, %v2107
    %2109 = vdwg.mxu0
    %v2110 = vpack.c.bf16 %v2106, %v2102
    %v2111 = vpack.c.bf16 %v2108, %v2104
    %v2112 = vmax.bf16 %v2110, 0
    %v2113 = vmax.bf16 %v2111, 0
    %v2114 = vld [vmem:[%s5] sm:$0xf]
    %v2115 = vld [vmem:[%s5 + $0x4] sm:$0xf]
    %v2116 = vld [vmem:[%s5 + $0x8] sm:$0xf]
    %v2117 = vld [vmem:[%s5 + $0xc] sm:$0xf]
    %v2118 = vld [vmem:[%s5 + $0x10] sm:$0xf]
    %v2119 = vld [vmem:[%s5 + $0x14] sm:$0xf]
    %v2120 = vld [vmem:[%s5 + $0x18] sm:$0xf]
    %v2121 = vld [vmem:[%s5 + $0x1c] sm:$0xf]
    %v2122 = vld [vmem:[%s5 + $0x20] sm:$0xf]
    %v2123 = vld [vmem:[%s5 + $0x24] sm:$0xf]
    %v2124 = vld [vmem:[%s5 + $0x28] sm:$0xf]
    %v2125 = vld [vmem:[%s5 + $0x2c] sm:$0xf]
    %v2126 = vld [vmem:[%s5 + $0x30] sm:$0xf]
    %v2127 = vld [vmem:[%s5 + $0x34] sm:$0xf]
    %v2128 = vld [vmem:[%s5 + $0x38] sm:$0xf]
    %v2129 = vld [vmem:[%s5 + $0x3c] sm:$0xf]
    %v2130 = vld [vmem:[%s5 + $0x40] sm:$0xf]
    %v2131 = vld [vmem:[%s5 + $0x44] sm:$0xf]
    %v2132 = vld [vmem:[%s5 + $0x48] sm:$0xf]
    %v2133 = vld [vmem:[%s5 + $0x4c] sm:$0xf]
    %v2134 = vld [vmem:[%s5 + $0x50] sm:$0xf]
    %v2135 = vld [vmem:[%s5 + $0x54] sm:$0xf]
    %v2136 = vld [vmem:[%s5 + $0x58] sm:$0xf]
    %v2137 = vld [vmem:[%s5 + $0x5c] sm:$0xf]
    %v2138 = vld [vmem:[%s5 + $0x60] sm:$0xf]
    %v2139 = vld [vmem:[%s5 + $0x64] sm:$0xf]
    %v2140 = vld [vmem:[%s5 + $0x68] sm:$0xf]
    %v2141 = vld [vmem:[%s5 + $0x6c] sm:$0xf]
    %v2142 = vld [vmem:[%s5 + $0x70] sm:$0xf]
    %v2143 = vld [vmem:[%s5 + $0x74] sm:$0xf]
    %v2144 = vld [vmem:[%s5 + $0x78] sm:$0xf]
    %v2145 = vld [vmem:[%s5 + $0x7c] sm:$0xf]
    %v2146 = vld [vmem:[%s6] sm:$0x1]
    %v2148 = vlaneseq
    %v2149 = vshrl.u32 %v2148, 7
    %v2150 = vsub.s32 0, %v2149
    %v2151 = vrot.slane %v2146, %v2150
    %v2185 = vunpack.c.l.b16 %v2114
    %v2186 = vunpack.c.l.b16 %v2115
    %v2187 = vunpack.c.l.b16 %v2116
    %v2188 = vunpack.c.l.b16 %v2117
    %v2189 = vunpack.c.l.b16 %v2118
    %v2190 = vunpack.c.l.b16 %v2119
    %v2191 = vunpack.c.l.b16 %v2120
    %v2192 = vunpack.c.l.b16 %v2121
    %v2193 = vunpack.c.l.b16 %v2122
    %v2194 = vunpack.c.l.b16 %v2123
    %v2195 = vunpack.c.l.b16 %v2124
    %v2196 = vunpack.c.l.b16 %v2125
    %v2197 = vunpack.c.l.b16 %v2126
    %v2198 = vunpack.c.l.b16 %v2127
    %v2199 = vunpack.c.l.b16 %v2128
    %v2200 = vunpack.c.l.b16 %v2129
    %v2201 = vunpack.c.l.b16 %v2130
    %v2202 = vunpack.c.l.b16 %v2131
    %v2203 = vunpack.c.l.b16 %v2132
    %v2204 = vunpack.c.l.b16 %v2133
    %v2205 = vunpack.c.l.b16 %v2134
    %v2206 = vunpack.c.l.b16 %v2135
    %v2207 = vunpack.c.l.b16 %v2136
    %v2208 = vunpack.c.l.b16 %v2137
    %v2209 = vunpack.c.l.b16 %v2138
    %v2210 = vunpack.c.l.b16 %v2139
    %v2211 = vunpack.c.l.b16 %v2140
    %v2212 = vunpack.c.l.b16 %v2141
    %v2213 = vunpack.c.l.b16 %v2142
    %v2214 = vunpack.c.l.b16 %v2143
    %v2215 = vunpack.c.l.b16 %v2144
    %v2216 = vunpack.c.l.b16 %v2145
    %v2217 = vpack.c.b16 %v2186, %v2185
    %v2218 = vpack.c.b16 %v2188, %v2187
    %v2219 = vpack.c.b16 %v2190, %v2189
    %v2220 = vpack.c.b16 %v2192, %v2191
    %v2221 = vpack.c.b16 %v2194, %v2193
    %v2222 = vpack.c.b16 %v2196, %v2195
    %v2223 = vpack.c.b16 %v2198, %v2197
    %v2224 = vpack.c.b16 %v2200, %v2199
    %v2225 = vpack.c.b16 %v2202, %v2201
    %v2226 = vpack.c.b16 %v2204, %v2203
    %v2227 = vpack.c.b16 %v2206, %v2205
    %v2228 = vpack.c.b16 %v2208, %v2207
    %v2229 = vpack.c.b16 %v2210, %v2209
    %v2230 = vpack.c.b16 %v2212, %v2211
    %v2231 = vpack.c.b16 %v2214, %v2213
    %v2232 = vpack.c.b16 %v2216, %v2215
    %2249 = vmatprep.subr.bf16.mxu0 0
    %2250 = vmatpush1.bf16.msra.mxu0 %v2217
    %2251 = vmatprep.subr.bf16.mxu0 0
    %2252 = vmatpush1.bf16.msra.mxu0 %v2218
    %2253 = vmatprep.subr.bf16.mxu0 0
    %2254 = vmatpush1.bf16.msra.mxu0 %v2219
    %2255 = vmatprep.subr.bf16.mxu0 0
    %2256 = vmatpush1.bf16.msra.mxu0 %v2220
    %2257 = vmatprep.subr.bf16.mxu0 0
    %2258 = vmatpush1.bf16.msra.mxu0 %v2221
    %2259 = vmatprep.subr.bf16.mxu0 0
    %2260 = vmatpush1.bf16.msra.mxu0 %v2222
    %2261 = vmatprep.subr.bf16.mxu0 0
    %2262 = vmatpush1.bf16.msra.mxu0 %v2223
    %2263 = vmatprep.subr.bf16.mxu0 0
    %2264 = vmatpush1.bf16.msra.mxu0 %v2224
    %2265 = vmatprep.subr.bf16.mxu0 0
    %2266 = vmatpush1.bf16.msra.mxu0 %v2225
    %2267 = vmatprep.subr.bf16.mxu0 0
    %2268 = vmatpush1.bf16.msra.mxu0 %v2226
    %2269 = vmatprep.subr.bf16.mxu0 0
    %2270 = vmatpush1.bf16.msra.mxu0 %v2227
    %2271 = vmatprep.subr.bf16.mxu0 0
    %2272 = vmatpush1.bf16.msra.mxu0 %v2228
    %2273 = vmatprep.subr.bf16.mxu0 0
    %2274 = vmatpush1.bf16.msra.mxu0 %v2229
    %2275 = vmatprep.subr.bf16.mxu0 0
    %2276 = vmatpush1.bf16.msra.mxu0 %v2230
    %2277 = vmatprep.subr.bf16.mxu0 0
    %2278 = vmatpush1.bf16.msra.mxu0 %v2231
    %2279 = vmatprep.subr.bf16.mxu0 0
    %2280 = vmatpush1.bf16.msra.mxu0 %v2232
    %2281 = vmatprep.mubr.bf16.mxu0 %v2113
    %2282 = vmatmul.mubr.bf16.gmra.mrb[0].mxu0 %v2112
    %v2283 = vpop.f32.mrb[0].mxu0
    %v2284 = vadd.f32 %v2151, %v2283
    %v2285 = vpop.f32.mrb[0].mxu0
    %v2286 = vpop.f32.mrb[0].mxu0
    %v2287 = vadd.f32 %v2151, %v2286
    %v2288 = vpop.f32.mrb[0].mxu0
    %2289 = vdwg.mxu0
    %v2290 = vpack.c.bf16 %v2287, %v2284
    %v2291 = vmax.bf16 %v2290, 0
    %v2292 = vld [vmem:[%s7] sm:$0xf]
    %v2293 = vld [vmem:[%s7 + $0x4] sm:$0xf]
    %v2294 = vld [vmem:[%s7 + $0x8] sm:$0xf]
    %v2295 = vld [vmem:[%s7 + $0xc] sm:$0xf]
    %v2296 = vld [vmem:[%s7 + $0x10] sm:$0xf]
    %v2297 = vld [vmem:[%s7 + $0x14] sm:$0xf]
    %v2298 = vld [vmem:[%s7 + $0x18] sm:$0xf]
    %v2299 = vld [vmem:[%s7 + $0x1c] sm:$0xf]
    %v2300 = vld [vmem:[%s7 + $0x20] sm:$0xf]
    %v2301 = vld [vmem:[%s7 + $0x24] sm:$0xf]
    %v2302 = vld [vmem:[%s7 + $0x28] sm:$0xf]
    %v2303 = vld [vmem:[%s7 + $0x2c] sm:$0xf]
    %v2304 = vld [vmem:[%s7 + $0x30] sm:$0xf]
    %v2305 = vld [vmem:[%s7 + $0x34] sm:$0xf]
    %v2306 = vld [vmem:[%s7 + $0x38] sm:$0xf]
    %v2307 = vld [vmem:[%s7 + $0x3c] sm:$0xf]
    %v2308 = vld [vmem:[%s8] sm:$0x1]
    %v2310 = vlaneseq
    %v2311 = vshrl.u32 %v2310, 7
    %v2312 = vsub.s32 0, %v2311
    %v2313 = vrot.slane %v2308, %v2312
    %v2331 = vunpack.c.l.b16 %v2292
    %v2332 = vunpack.c.l.b16 %v2293
    %v2333 = vunpack.c.l.b16 %v2294
    %v2334 = vunpack.c.l.b16 %v2295
    %v2335 = vunpack.c.l.b16 %v2296
    %v2336 = vunpack.c.l.b16 %v2297
    %v2337 = vunpack.c.l.b16 %v2298
    %v2338 = vunpack.c.l.b16 %v2299
    %v2339 = vunpack.c.l.b16 %v2300
    %v2340 = vunpack.c.l.b16 %v2301
    %v2341 = vunpack.c.l.b16 %v2302
    %v2342 = vunpack.c.l.b16 %v2303
    %v2343 = vunpack.c.l.b16 %v2304
    %v2344 = vunpack.c.l.b16 %v2305
    %v2345 = vunpack.c.l.b16 %v2306
    %v2346 = vunpack.c.l.b16 %v2307
    %v2347 = vpack.c.b16 %v2332, %v2331
    %v2348 = vpack.c.b16 %v2334, %v2333
    %v2349 = vpack.c.b16 %v2336, %v2335
    %v2350 = vpack.c.b16 %v2338, %v2337
    %v2351 = vpack.c.b16 %v2340, %v2339
    %v2352 = vpack.c.b16 %v2342, %v2341
    %v2353 = vpack.c.b16 %v2344, %v2343
    %v2354 = vpack.c.b16 %v2346, %v2345
    %2363 = vmatprep.subr.bf16.mxu0 0
    %2364 = vmatpush1.bf16.msra.mxu0 %v2347
    %2365 = vmatprep.subr.bf16.mxu0 0
    %2366 = vmatpush1.bf16.msra.mxu0 %v2348
    %2367 = vmatprep.subr.bf16.mxu0 0
    %2368 = vmatpush1.bf16.msra.mxu0 %v2349
    %2369 = vmatprep.subr.bf16.mxu0 0
    %2370 = vmatpush1.bf16.msra.mxu0 %v2350
    %2371 = vmatprep.subr.bf16.mxu0 0
    %2372 = vmatpush1.bf16.msra.mxu0 %v2351
    %2373 = vmatprep.subr.bf16.mxu0 0
    %2374 = vmatpush1.bf16.msra.mxu0 %v2352
    %2375 = vmatprep.subr.bf16.mxu0 0
    %2376 = vmatpush1.bf16.msra.mxu0 %v2353
    %2377 = vmatprep.subr.bf16.mxu0 0
    %2378 = vmatpush1.bf16.msra.mxu0 %v2354
    %2379 = vmatprep.subr.bf16.mxu0 0
    %2380 = vmatpush1.bf16.msra.mxu0 0
    %2381 = vmatprep.subr.bf16.mxu0 0
    %2382 = vmatpush1.bf16.msra.mxu0 0
    %2383 = vmatprep.subr.bf16.mxu0 0
    %2384 = vmatpush1.bf16.msra.mxu0 0
    %2385 = vmatprep.subr.bf16.mxu0 0
    %2386 = vmatpush1.bf16.msra.mxu0 0
    %2387 = vmatprep.subr.bf16.mxu0 0
    %2388 = vmatpush1.bf16.msra.mxu0 0
    %2389 = vmatprep.subr.bf16.mxu0 0
    %2390 = vmatpush1.bf16.msra.mxu0 0
    %2391 = vmatprep.subr.bf16.mxu0 0
    %2392 = vmatpush1.bf16.msra.mxu0 0
    %2393 = vmatprep.subr.bf16.mxu0 0
    %2394 = vmatpush1.bf16.msra.mxu0 0
    %2395 = vmatprep.mubr.bf16.mxu0 0
    %2396 = vmatmul.mubr.bf16.gmra.mrb[0].mxu0 %v2291
    %v2397 = vpop.f32.mrb[0].mxu0
    %v2398 = vadd.f32 %v2313, %v2397
    %v2399 = vpop.f32.mrb[0].mxu0
    %v2400 = vpop.f32.mrb[0].mxu0
    %v2401 = vadd.f32 %v2313, %v2400
    %v2402 = vpop.f32.mrb[0].mxu0
    %2403 = vdwg.mxu0
    %v2404 = vpack.c.bf16 %v2401, %v2398
    %v2405 = vmax.bf16 %v2404, 0
    %v2406 = vld [vmem:[%s9] sm:$0xf]
    %v2407 = vld [vmem:[%s9 + $0x4] sm:$0xf]
    %v2408 = vld [vmem:[%s9 + $0x8] sm:$0xf]
    %v2409 = vld [vmem:[%s9 + $0xc] sm:$0xf]
    %v2410 = vld [vmem:[%s9 + $0x10] sm:$0xf]
    %v2411 = vld [vmem:[%s9 + $0x14] sm:$0xf]
    %v2412 = vld [vmem:[%s9 + $0x18] sm:$0xf]
    %v2413 = vld [vmem:[%s9 + $0x1c] sm:$0xf]
    %v2414 = vld [vmem:[%s9 + $0x20] sm:$0xf]
    %v2415 = vld [vmem:[%s9 + $0x24] sm:$0xf]
    %v2416 = vld [vmem:[%s9 + $0x28] sm:$0xf]
    %v2417 = vld [vmem:[%s9 + $0x2c] sm:$0xf]
    %v2418 = vld [vmem:[%s9 + $0x30] sm:$0xf]
    %v2419 = vld [vmem:[%s9 + $0x34] sm:$0xf]
    %v2420 = vld [vmem:[%s9 + $0x38] sm:$0xf]
    %v2421 = vld [vmem:[%s9 + $0x3c] sm:$0xf]
    %v2422 = vld [vmem:[%s10] sm:$0x1]
    %v2424 = vlaneseq
    %v2425 = vshrl.u32 %v2424, 7
    %v2426 = vsub.s32 0, %v2425
    %v2427 = vrot.slane %v2422, %v2426
    %v2445 = vunpack.c.l.b16 %v2406
    %v2446 = vunpack.c.l.b16 %v2407
    %v2447 = vunpack.c.l.b16 %v2408
    %v2448 = vunpack.c.l.b16 %v2409
    %v2449 = vunpack.c.l.b16 %v2410
    %v2450 = vunpack.c.l.b16 %v2411
    %v2451 = vunpack.c.l.b16 %v2412
    %v2452 = vunpack.c.l.b16 %v2413
    %v2453 = vunpack.c.l.b16 %v2414
    %v2454 = vunpack.c.l.b16 %v2415
    %v2455 = vunpack.c.l.b16 %v2416
    %v2456 = vunpack.c.l.b16 %v2417
    %v2457 = vunpack.c.l.b16 %v2418
    %v2458 = vunpack.c.l.b16 %v2419
    %v2459 = vunpack.c.l.b16 %v2420
    %v2460 = vunpack.c.l.b16 %v2421
    %v2461 = vpack.c.b16 %v2446, %v2445
    %v2462 = vpack.c.b16 %v2448, %v2447
    %v2463 = vpack.c.b16 %v2450, %v2449
    %v2464 = vpack.c.b16 %v2452, %v2451
    %v2465 = vpack.c.b16 %v2454, %v2453
    %v2466 = vpack.c.b16 %v2456, %v2455
    %v2467 = vpack.c.b16 %v2458, %v2457
    %v2468 = vpack.c.b16 %v2460, %v2459
    %2477 = vmatprep.subr.bf16.mxu0 0
    %2478 = vmatpush1.bf16.msra.mxu0 %v2461
    %2479 = vmatprep.subr.bf16.mxu0 0
    %2480 = vmatpush1.bf16.msra.mxu0 %v2462
    %2481 = vmatprep.subr.bf16.mxu0 0
    %2482 = vmatpush1.bf16.msra.mxu0 %v2463
    %2483 = vmatprep.subr.bf16.mxu0 0
    %2484 = vmatpush1.bf16.msra.mxu0 %v2464
    %2485 = vmatprep.subr.bf16.mxu0 0
    %2486 = vmatpush1.bf16.msra.mxu0 %v2465
    %2487 = vmatprep.subr.bf16.mxu0 0
    %2488 = vmatpush1.bf16.msra.mxu0 %v2466
    %2489 = vmatprep.subr.bf16.mxu0 0
    %2490 = vmatpush1.bf16.msra.mxu0 %v2467
    %2491 = vmatprep.subr.bf16.mxu0 0
    %2492 = vmatpush1.bf16.msra.mxu0 %v2468
    %2493 = vmatprep.subr.bf16.mxu0 0
    %2494 = vmatpush1.bf16.msra.mxu0 0
    %2495 = vmatprep.subr.bf16.mxu0 0
    %2496 = vmatpush1.bf16.msra.mxu0 0
    %2497 = vmatprep.subr.bf16.mxu0 0
    %2498 = vmatpush1.bf16.msra.mxu0 0
    %2499 = vmatprep.subr.bf16.mxu0 0
    %2500 = vmatpush1.bf16.msra.mxu0 0
    %2501 = vmatprep.subr.bf16.mxu0 0
    %2502 = vmatpush1.bf16.msra.mxu0 0
    %2503 = vmatprep.subr.bf16.mxu0 0
    %2504 = vmatpush1.bf16.msra.mxu0 0
    %2505 = vmatprep.subr.bf16.mxu0 0
    %2506 = vmatpush1.bf16.msra.mxu0 0
    %2507 = vmatprep.subr.bf16.mxu0 0
    %2508 = vmatpush1.bf16.msra.mxu0 0
    %2509 = vmatprep.mubr.bf16.mxu0 0
    %2510 = vmatmul.mubr.bf16.gmra.mrb[0].mxu0 %v2405
    %v2511 = vpop.f32.mrb[0].mxu0
    %v2512 = vadd.f32 %v2427, %v2511
    %v2513 = vpop.f32.mrb[0].mxu0
    %v2514 = vpop.f32.mrb[0].mxu0
    %v2515 = vadd.f32 %v2427, %v2514
    %v2516 = vpop.f32.mrb[0].mxu0
    %2517 = vdwg.mxu0
    %2518 = vst [vmem:[%s11] sm:$0xff] %v2512
    %2519 = vst [vmem:[%s11 + $0x8] sm:$0xff] %v2515
    // Predicated region
    $region50: #{mlp_forward.1} parent=1 // pred_check
      _
    $region51: #{mlp_forward.1} parent=1 // pred_check_branch
      %2521 = sbr.rel (0) target = $region53
    $region52: #{mlp_forward.1} parent=1 // pred_region
      _
    $region53: #{mlp_forward.1} parent=1 // pred_fallthru
      _
    // Predicated region
    $region54: #{mlp_forward.1} parent=1 // pred_check
      _
    $region55: #{mlp_forward.1} parent=1 // pred_check_branch
      %2523 = sbr.rel (0) target = $region57
    $region56: #{mlp_forward.1} parent=1 // pred_region
      _
    $region57: #{mlp_forward.1} parent=1 // pred_fallthru
      _
    %2524 = vsyncpa [#allocation3], 1

</llo_original>
